<compile_context>
chip_gen: v7x
topology: tpu7x:2x2x1
jax: 0.10.0
libtpu: 0.0.40
codegen_flags: <defaults>
</compile_context>

<pallas_src>
import functools

import jax
import jax.numpy as jnp
from jax.experimental import pallas as pl
from jax.experimental.pallas import tpu as pltpu

KSIZE = 3  # 3x3x3 kernels, 3 of them (allkernels shape (3,3,3,3))


def _allkernelsdiff_kernel(x_ref, kflat_ref, o_ref, *, D, H, W, nk, tn):
    # x_ref    : VMEM (tn, D, H*W)      f32 -- TN unpadded volumes (lane-dense)
    # kflat_ref: SMEM (nk, 27)          f32 -- the nk flattened 3x3x3 filters
    # o_ref    : VMEM (tn, nk, D, H*W)  f32 -- all nk outputs for the TN batches
    HW = H * W

    def lane_roll(v, shift):
        s = shift % HW
        return v if s == 0 else pltpu.roll(v, s, axis=1)

    def sublane_roll(v, shift):
        s = shift % D
        return v if s == 0 else pltpu.roll(v, s, axis=0)

    # --- wrap masks built in-kernel (no HBM input), hoisted across batches ---
    wid = jax.lax.broadcasted_iota(jnp.int32, (D, HW), 1) % W
    is_w_first = wid == 0
    is_w_last = wid == (W - 1)

    # --- hoist all filter taps out of SMEM once ------------------------------
    wts = [[kflat_ref[k, t] for t in range(27)] for k in range(nk)]

    for b in range(tn):
        x = x_ref[b]

        # circular shift along W (within each H row):
        #   xw[j][d, h*W + w] = x[d, h*W + (w + j - 1) % W]
        xw_minus = jnp.where(is_w_first, lane_roll(x, -(W - 1)), lane_roll(x, 1))
        xw_plus = jnp.where(is_w_last, lane_roll(x, W - 1), lane_roll(x, -1))
        xw = (xw_minus, x, xw_plus)

        # (kh,kw) outermost: one shifted operand at a time, accumulated into
        # all 9 accumulators acc[k][kd] (3 filters x 3 kd planes).
        acc = [[None] * 3 for _ in range(nk)]
        for kh in range(3):
            for kw in range(3):
                # circular shift along H: exact lane roll by multiples of W
                op = lane_roll(xw[kw], -(kh - 1) * W)
                for k in range(nk):
                    for kd in range(3):
                        term = wts[k][kd * 9 + kh * 3 + kw] * op
                        acc[k][kd] = term if acc[k][kd] is None else acc[k][kd] + term

        # circular D shift folded in via 2 sublane rolls per filter:
        #   out_k[d] = A1[d] + A0[(d-1)%D] + A2[(d+1)%D]
        for k in range(nk):
            out_k = (acc[k][1]
                     + sublane_roll(acc[k][0], 1)
                     + sublane_roll(acc[k][2], -1))
            o_ref[b, k] = out_k.astype(o_ref.dtype)


def allkernelsdiff_forward(x, allkernels, *, batch_block=8):
    """x: (N, 1, D, H, W) float32; allkernels: (3, 3, 3, 3) float32."""
    N, C, D, H, W = x.shape
    assert C == 1, "module applies single-input-channel 3D convs"
    nk, kD, kH, kW = allkernels.shape
    assert (kD, kH, kW) == (KSIZE, KSIZE, KSIZE)
    HW = H * W

    # Roll-based shifts are fastest on native (8,128)-aligned f32 tiles.
    # TODO(synk): generalize to unaligned D / H*W (pad-to-tile + masked slices).
    assert D % 8 == 0 and HW % 128 == 0, (
        "this kernel expects D % 8 == 0 and (H*W) % 128 == 0")

    xf = x.astype(jnp.float32).reshape(N, D, HW)          # lane-dense layout
    kflat = allkernels.reshape(nk, KSIZE ** 3).astype(jnp.float32)

    # Batch blocking: TN volumes per grid step (amortize per-step overhead).
    tn = max(1, min(batch_block, N))
    n_pad = (-N) % tn
    if n_pad:
        xf = jnp.pad(xf, ((0, n_pad), (0, 0), (0, 0)))
    Np = N + n_pad

    kernel = functools.partial(_allkernelsdiff_kernel,
                               D=D, H=H, W=W, nk=nk, tn=tn)

    # Advisory cost for XLA's scheduler around the custom call.
    cost = pl.CostEstimate(
        flops=2 * (KSIZE ** 3) * nk * Np * D * HW,
        transcendentals=0,
        bytes_accessed=(Np * D * HW * 4            # input
                        + Np * nk * D * HW * 4     # output
                        + nk * KSIZE ** 3 * 4))    # weights

    out = pl.pallas_call(
        kernel,
        out_shape=jax.ShapeDtypeStruct((Np, nk, D, HW), jnp.float32),
        grid_spec=pltpu.PrefetchScalarGridSpec(
            num_scalar_prefetch=0,
            grid=(Np // tn,),
            in_specs=[
                # TN unpadded volumes per grid step, whole (D, H*W) blocks
                pl.BlockSpec((tn, D, HW), lambda n: (n, 0, 0)),
                # all filter taps in SMEM, read as scalars in-kernel
                pl.BlockSpec(memory_space=pltpu.MemorySpace.SMEM),
            ],
            out_specs=pl.BlockSpec((tn, nk, D, HW), lambda n: (n, 0, 0, 0)),
        ),
        compiler_params=pltpu.CompilerParams(
            # batch-block axis shards across TCs on v7x; harmless on v5e/v6e
            dimension_semantics=("parallel",),
            # conservative limit; re-derive per generation if blocks are scaled
            # up (<=~56 MiB on v7x, up to ~100 MiB on v5e/v6e).
            vmem_limit_bytes=32 * 1024 * 1024,
        ),
        cost_estimate=cost,
    )(xf, kflat)

    out = out[:N] if n_pad else out
    return out.reshape(N, nk, D, H, W).astype(x.dtype)


def _reference(x, allkernels):
    """Plain-JAX reference (circular pad + valid 3D cross-correlation)."""
    xp = jnp.pad(x, ((0, 0), (0, 0), (1, 1), (1, 1), (1, 1)), mode="wrap")
    w = allkernels[:, None, :, :, :]  # (3, 1, 3, 3, 3)  OIDHW
    return jax.lax.conv_general_dilated(
        xp, w, window_strides=(1, 1, 1), padding="VALID",
        dimension_numbers=("NCDHW", "OIDHW", "NCDHW"),
        precision=jax.lax.Precision.HIGHEST)


if __name__ == "__main__":
    key = jax.random.PRNGKey(0)
    kx, kw_key = jax.random.split(key)

    # Small demo shape; H*W = 128 keeps every rolled tile a native f32 vreg.
    N, D, H, W = 2, 8, 16, 8
    x = jax.random.normal(kx, (N, 1, D, H, W), dtype=jnp.float32)
    allkernels = jax.random.normal(kw_key, (3, KSIZE, KSIZE, KSIZE),
                                   dtype=jnp.float32)

    out = jax.block_until_ready(allkernelsdiff_forward(x, allkernels))
    ref = jax.block_until_ready(_reference(x, allkernels))

    assert out.shape == (N, 3, D, H, W)
    assert jnp.allclose(out, ref, atol=1e-4, rtol=1e-4)

    print("KERNEL_OK")
</pallas_src>

<mosaic_0001>
module attributes {stable_mosaic.version = 11 : i64} {
  func.func @_allkernelsdiff_kernel(%arg0: i32, %arg1: memref<2x8x128xf32, #tpu.memory_space<vmem>>, %arg2: memref<3x27xf32, #tpu.memory_space<smem>>, %arg3: memref<2x3x8x128xf32, #tpu.memory_space<vmem>>) attributes {dimension_semantics = [#tpu.dimension_semantics<parallel>], iteration_bounds = array<i64: 1>, scalar_prefetch = 0 : i64, scratch_operands = 0 : i64, tpu.core_type = #tpu.core_type<tc>, window_params = [{transform_indices = @transform_0, window_bounds = array<i64: 2, 8, 128>}, {transform_indices = @transform_1, window_bounds = array<i64: 3, 27>}, {transform_indices = @transform_2, window_bounds = array<i64: 2, 3, 8, 128>}]} {
    %0 = tpu.iota {dimensions = array<i32: 1>} : vector<8x128xi32>
    %c8_i32 = arith.constant 8 : i32
    %c0_i32 = arith.constant 0 : i32
    %1 = arith.cmpi eq, %c8_i32, %c0_i32 : i32
    %c1_i32 = arith.constant 1 : i32
    %2 = arith.select %1, %c1_i32, %c8_i32 : i32
    %3 = vector.broadcast %2 : i32 to vector<8x128xi32>
    %4 = arith.remsi %0, %3 : vector<8x128xi32>
    %c0_i32_0 = arith.constant 0 : i32
    %5 = vector.broadcast %c0_i32_0 : i32 to vector<8x128xi32>
    %6 = arith.cmpi ne, %4, %5 : vector<8x128xi32>
    %c0_i32_1 = arith.constant 0 : i32
    %7 = vector.broadcast %c0_i32_1 : i32 to vector<8x128xi32>
    %8 = arith.cmpi slt, %4, %7 : vector<8x128xi32>
    %c0_i32_2 = arith.constant 0 : i32
    %9 = arith.cmpi slt, %2, %c0_i32_2 : i32
    %10 = vector.broadcast %9 : i1 to vector<8x128xi1>
    %11 = vector.broadcast %10 : vector<8x128xi1> to vector<8x128xi1>
    %12 = arith.xori %8, %11 : vector<8x128xi1>
    %13 = arith.andi %12, %6 : vector<8x128xi1>
    %14 = vector.broadcast %2 : i32 to vector<8x128xi32>
    %15 = arith.addi %4, %14 : vector<8x128xi32>
    %16 = arith.select %13, %15, %4 : vector<8x128xi1>, vector<8x128xi32>
    %c0_i32_3 = arith.constant 0 : i32
    %17 = vector.broadcast %c0_i32_3 : i32 to vector<8x128xi32>
    %18 = arith.cmpi eq, %16, %17 : vector<8x128xi32>
    %c7_i32 = arith.constant 7 : i32
    %19 = vector.broadcast %c7_i32 : i32 to vector<8x128xi32>
    %20 = arith.cmpi eq, %16, %19 : vector<8x128xi32>
    %c0 = arith.constant 0 : index
    %c0_4 = arith.constant 0 : index
    %21 = memref.load %arg2[%c0, %c0_4] : memref<3x27xf32, #tpu.memory_space<smem>>
    %c0_5 = arith.constant 0 : index
    %c1 = arith.constant 1 : index
    %22 = memref.load %arg2[%c0_5, %c1] : memref<3x27xf32, #tpu.memory_space<smem>>
    %c0_6 = arith.constant 0 : index
    %c2 = arith.constant 2 : index
    %23 = memref.load %arg2[%c0_6, %c2] : memref<3x27xf32, #tpu.memory_space<smem>>
    %c0_7 = arith.constant 0 : index
    %c3 = arith.constant 3 : index
    %24 = memref.load %arg2[%c0_7, %c3] : memref<3x27xf32, #tpu.memory_space<smem>>
    %c0_8 = arith.constant 0 : index
    %c4 = arith.constant 4 : index
    %25 = memref.load %arg2[%c0_8, %c4] : memref<3x27xf32, #tpu.memory_space<smem>>
    %c0_9 = arith.constant 0 : index
    %c5 = arith.constant 5 : index
    %26 = memref.load %arg2[%c0_9, %c5] : memref<3x27xf32, #tpu.memory_space<smem>>
    %c0_10 = arith.constant 0 : index
    %c6 = arith.constant 6 : index
    %27 = memref.load %arg2[%c0_10, %c6] : memref<3x27xf32, #tpu.memory_space<smem>>
    %c0_11 = arith.constant 0 : index
    %c7 = arith.constant 7 : index
    %28 = memref.load %arg2[%c0_11, %c7] : memref<3x27xf32, #tpu.memory_space<smem>>
    %c0_12 = arith.constant 0 : index
    %c8 = arith.constant 8 : index
    %29 = memref.load %arg2[%c0_12, %c8] : memref<3x27xf32, #tpu.memory_space<smem>>
    %c0_13 = arith.constant 0 : index
    %c9 = arith.constant 9 : index
    %30 = memref.load %arg2[%c0_13, %c9] : memref<3x27xf32, #tpu.memory_space<smem>>
    %c0_14 = arith.constant 0 : index
    %c10 = arith.constant 10 : index
    %31 = memref.load %arg2[%c0_14, %c10] : memref<3x27xf32, #tpu.memory_space<smem>>
    %c0_15 = arith.constant 0 : index
    %c11 = arith.constant 11 : index
    %32 = memref.load %arg2[%c0_15, %c11] : memref<3x27xf32, #tpu.memory_space<smem>>
    %c0_16 = arith.constant 0 : index
    %c12 = arith.constant 12 : index
    %33 = memref.load %arg2[%c0_16, %c12] : memref<3x27xf32, #tpu.memory_space<smem>>
    %c0_17 = arith.constant 0 : index
    %c13 = arith.constant 13 : index
    %34 = memref.load %arg2[%c0_17, %c13] : memref<3x27xf32, #tpu.memory_space<smem>>
    %c0_18 = arith.constant 0 : index
    %c14 = arith.constant 14 : index
    %35 = memref.load %arg2[%c0_18, %c14] : memref<3x27xf32, #tpu.memory_space<smem>>
    %c0_19 = arith.constant 0 : index
    %c15 = arith.constant 15 : index
    %36 = memref.load %arg2[%c0_19, %c15] : memref<3x27xf32, #tpu.memory_space<smem>>
    %c0_20 = arith.constant 0 : index
    %c16 = arith.constant 16 : index
    %37 = memref.load %arg2[%c0_20, %c16] : memref<3x27xf32, #tpu.memory_space<smem>>
    %c0_21 = arith.constant 0 : index
    %c17 = arith.constant 17 : index
    %38 = memref.load %arg2[%c0_21, %c17] : memref<3x27xf32, #tpu.memory_space<smem>>
    %c0_22 = arith.constant 0 : index
    %c18 = arith.constant 18 : index
    %39 = memref.load %arg2[%c0_22, %c18] : memref<3x27xf32, #tpu.memory_space<smem>>
    %c0_23 = arith.constant 0 : index
    %c19 = arith.constant 19 : index
    %40 = memref.load %arg2[%c0_23, %c19] : memref<3x27xf32, #tpu.memory_space<smem>>
    %c0_24 = arith.constant 0 : index
    %c20 = arith.constant 20 : index
    %41 = memref.load %arg2[%c0_24, %c20] : memref<3x27xf32, #tpu.memory_space<smem>>
    %c0_25 = arith.constant 0 : index
    %c21 = arith.constant 21 : index
    %42 = memref.load %arg2[%c0_25, %c21] : memref<3x27xf32, #tpu.memory_space<smem>>
    %c0_26 = arith.constant 0 : index
    %c22 = arith.constant 22 : index
    %43 = memref.load %arg2[%c0_26, %c22] : memref<3x27xf32, #tpu.memory_space<smem>>
    %c0_27 = arith.constant 0 : index
    %c23 = arith.constant 23 : index
    %44 = memref.load %arg2[%c0_27, %c23] : memref<3x27xf32, #tpu.memory_space<smem>>
    %c0_28 = arith.constant 0 : index
    %c24 = arith.constant 24 : index
    %45 = memref.load %arg2[%c0_28, %c24] : memref<3x27xf32, #tpu.memory_space<smem>>
    %c0_29 = arith.constant 0 : index
    %c25 = arith.constant 25 : index
    %46 = memref.load %arg2[%c0_29, %c25] : memref<3x27xf32, #tpu.memory_space<smem>>
    %c0_30 = arith.constant 0 : index
    %c26 = arith.constant 26 : index
    %47 = memref.load %arg2[%c0_30, %c26] : memref<3x27xf32, #tpu.memory_space<smem>>
    %c1_31 = arith.constant 1 : index
    %c0_32 = arith.constant 0 : index
    %48 = memref.load %arg2[%c1_31, %c0_32] : memref<3x27xf32, #tpu.memory_space<smem>>
    %c1_33 = arith.constant 1 : index
    %c1_34 = arith.constant 1 : index
    %49 = memref.load %arg2[%c1_33, %c1_34] : memref<3x27xf32, #tpu.memory_space<smem>>
    %c1_35 = arith.constant 1 : index
    %c2_36 = arith.constant 2 : index
    %50 = memref.load %arg2[%c1_35, %c2_36] : memref<3x27xf32, #tpu.memory_space<smem>>
    %c1_37 = arith.constant 1 : index
    %c3_38 = arith.constant 3 : index
    %51 = memref.load %arg2[%c1_37, %c3_38] : memref<3x27xf32, #tpu.memory_space<smem>>
    %c1_39 = arith.constant 1 : index
    %c4_40 = arith.constant 4 : index
    %52 = memref.load %arg2[%c1_39, %c4_40] : memref<3x27xf32, #tpu.memory_space<smem>>
    %c1_41 = arith.constant 1 : index
    %c5_42 = arith.constant 5 : index
    %53 = memref.load %arg2[%c1_41, %c5_42] : memref<3x27xf32, #tpu.memory_space<smem>>
    %c1_43 = arith.constant 1 : index
    %c6_44 = arith.constant 6 : index
    %54 = memref.load %arg2[%c1_43, %c6_44] : memref<3x27xf32, #tpu.memory_space<smem>>
    %c1_45 = arith.constant 1 : index
    %c7_46 = arith.constant 7 : index
    %55 = memref.load %arg2[%c1_45, %c7_46] : memref<3x27xf32, #tpu.memory_space<smem>>
    %c1_47 = arith.constant 1 : index
    %c8_48 = arith.constant 8 : index
    %56 = memref.load %arg2[%c1_47, %c8_48] : memref<3x27xf32, #tpu.memory_space<smem>>
    %c1_49 = arith.constant 1 : index
    %c9_50 = arith.constant 9 : index
    %57 = memref.load %arg2[%c1_49, %c9_50] : memref<3x27xf32, #tpu.memory_space<smem>>
    %c1_51 = arith.constant 1 : index
    %c10_52 = arith.constant 10 : index
    %58 = memref.load %arg2[%c1_51, %c10_52] : memref<3x27xf32, #tpu.memory_space<smem>>
    %c1_53 = arith.constant 1 : index
    %c11_54 = arith.constant 11 : index
    %59 = memref.load %arg2[%c1_53, %c11_54] : memref<3x27xf32, #tpu.memory_space<smem>>
    %c1_55 = arith.constant 1 : index
    %c12_56 = arith.constant 12 : index
    %60 = memref.load %arg2[%c1_55, %c12_56] : memref<3x27xf32, #tpu.memory_space<smem>>
    %c1_57 = arith.constant 1 : index
    %c13_58 = arith.constant 13 : index
    %61 = memref.load %arg2[%c1_57, %c13_58] : memref<3x27xf32, #tpu.memory_space<smem>>
    %c1_59 = arith.constant 1 : index
    %c14_60 = arith.constant 14 : index
    %62 = memref.load %arg2[%c1_59, %c14_60] : memref<3x27xf32, #tpu.memory_space<smem>>
    %c1_61 = arith.constant 1 : index
    %c15_62 = arith.constant 15 : index
    %63 = memref.load %arg2[%c1_61, %c15_62] : memref<3x27xf32, #tpu.memory_space<smem>>
    %c1_63 = arith.constant 1 : index
    %c16_64 = arith.constant 16 : index
    %64 = memref.load %arg2[%c1_63, %c16_64] : memref<3x27xf32, #tpu.memory_space<smem>>
    %c1_65 = arith.constant 1 : index
    %c17_66 = arith.constant 17 : index
    %65 = memref.load %arg2[%c1_65, %c17_66] : memref<3x27xf32, #tpu.memory_space<smem>>
    %c1_67 = arith.constant 1 : index
    %c18_68 = arith.constant 18 : index
    %66 = memref.load %arg2[%c1_67, %c18_68] : memref<3x27xf32, #tpu.memory_space<smem>>
    %c1_69 = arith.constant 1 : index
    %c19_70 = arith.constant 19 : index
    %67 = memref.load %arg2[%c1_69, %c19_70] : memref<3x27xf32, #tpu.memory_space<smem>>
    %c1_71 = arith.constant 1 : index
    %c20_72 = arith.constant 20 : index
    %68 = memref.load %arg2[%c1_71, %c20_72] : memref<3x27xf32, #tpu.memory_space<smem>>
    %c1_73 = arith.constant 1 : index
    %c21_74 = arith.constant 21 : index
    %69 = memref.load %arg2[%c1_73, %c21_74] : memref<3x27xf32, #tpu.memory_space<smem>>
    %c1_75 = arith.constant 1 : index
    %c22_76 = arith.constant 22 : index
    %70 = memref.load %arg2[%c1_75, %c22_76] : memref<3x27xf32, #tpu.memory_space<smem>>
    %c1_77 = arith.constant 1 : index
    %c23_78 = arith.constant 23 : index
    %71 = memref.load %arg2[%c1_77, %c23_78] : memref<3x27xf32, #tpu.memory_space<smem>>
    %c1_79 = arith.constant 1 : index
    %c24_80 = arith.constant 24 : index
    %72 = memref.load %arg2[%c1_79, %c24_80] : memref<3x27xf32, #tpu.memory_space<smem>>
    %c1_81 = arith.constant 1 : index
    %c25_82 = arith.constant 25 : index
    %73 = memref.load %arg2[%c1_81, %c25_82] : memref<3x27xf32, #tpu.memory_space<smem>>
    %c1_83 = arith.constant 1 : index
    %c26_84 = arith.constant 26 : index
    %74 = memref.load %arg2[%c1_83, %c26_84] : memref<3x27xf32, #tpu.memory_space<smem>>
    %c2_85 = arith.constant 2 : index
    %c0_86 = arith.constant 0 : index
    %75 = memref.load %arg2[%c2_85, %c0_86] : memref<3x27xf32, #tpu.memory_space<smem>>
    %c2_87 = arith.constant 2 : index
    %c1_88 = arith.constant 1 : index
    %76 = memref.load %arg2[%c2_87, %c1_88] : memref<3x27xf32, #tpu.memory_space<smem>>
    %c2_89 = arith.constant 2 : index
    %c2_90 = arith.constant 2 : index
    %77 = memref.load %arg2[%c2_89, %c2_90] : memref<3x27xf32, #tpu.memory_space<smem>>
    %c2_91 = arith.constant 2 : index
    %c3_92 = arith.constant 3 : index
    %78 = memref.load %arg2[%c2_91, %c3_92] : memref<3x27xf32, #tpu.memory_space<smem>>
    %c2_93 = arith.constant 2 : index
    %c4_94 = arith.constant 4 : index
    %79 = memref.load %arg2[%c2_93, %c4_94] : memref<3x27xf32, #tpu.memory_space<smem>>
    %c2_95 = arith.constant 2 : index
    %c5_96 = arith.constant 5 : index
    %80 = memref.load %arg2[%c2_95, %c5_96] : memref<3x27xf32, #tpu.memory_space<smem>>
    %c2_97 = arith.constant 2 : index
    %c6_98 = arith.constant 6 : index
    %81 = memref.load %arg2[%c2_97, %c6_98] : memref<3x27xf32, #tpu.memory_space<smem>>
    %c2_99 = arith.constant 2 : index
    %c7_100 = arith.constant 7 : index
    %82 = memref.load %arg2[%c2_99, %c7_100] : memref<3x27xf32, #tpu.memory_space<smem>>
    %c2_101 = arith.constant 2 : index
    %c8_102 = arith.constant 8 : index
    %83 = memref.load %arg2[%c2_101, %c8_102] : memref<3x27xf32, #tpu.memory_space<smem>>
    %c2_103 = arith.constant 2 : index
    %c9_104 = arith.constant 9 : index
    %84 = memref.load %arg2[%c2_103, %c9_104] : memref<3x27xf32, #tpu.memory_space<smem>>
    %c2_105 = arith.constant 2 : index
    %c10_106 = arith.constant 10 : index
    %85 = memref.load %arg2[%c2_105, %c10_106] : memref<3x27xf32, #tpu.memory_space<smem>>
    %c2_107 = arith.constant 2 : index
    %c11_108 = arith.constant 11 : index
    %86 = memref.load %arg2[%c2_107, %c11_108] : memref<3x27xf32, #tpu.memory_space<smem>>
    %c2_109 = arith.constant 2 : index
    %c12_110 = arith.constant 12 : index
    %87 = memref.load %arg2[%c2_109, %c12_110] : memref<3x27xf32, #tpu.memory_space<smem>>
    %c2_111 = arith.constant 2 : index
    %c13_112 = arith.constant 13 : index
    %88 = memref.load %arg2[%c2_111, %c13_112] : memref<3x27xf32, #tpu.memory_space<smem>>
    %c2_113 = arith.constant 2 : index
    %c14_114 = arith.constant 14 : index
    %89 = memref.load %arg2[%c2_113, %c14_114] : memref<3x27xf32, #tpu.memory_space<smem>>
    %c2_115 = arith.constant 2 : index
    %c15_116 = arith.constant 15 : index
    %90 = memref.load %arg2[%c2_115, %c15_116] : memref<3x27xf32, #tpu.memory_space<smem>>
    %c2_117 = arith.constant 2 : index
    %c16_118 = arith.constant 16 : index
    %91 = memref.load %arg2[%c2_117, %c16_118] : memref<3x27xf32, #tpu.memory_space<smem>>
    %c2_119 = arith.constant 2 : index
    %c17_120 = arith.constant 17 : index
    %92 = memref.load %arg2[%c2_119, %c17_120] : memref<3x27xf32, #tpu.memory_space<smem>>
    %c2_121 = arith.constant 2 : index
    %c18_122 = arith.constant 18 : index
    %93 = memref.load %arg2[%c2_121, %c18_122] : memref<3x27xf32, #tpu.memory_space<smem>>
    %c2_123 = arith.constant 2 : index
    %c19_124 = arith.constant 19 : index
    %94 = memref.load %arg2[%c2_123, %c19_124] : memref<3x27xf32, #tpu.memory_space<smem>>
    %c2_125 = arith.constant 2 : index
    %c20_126 = arith.constant 20 : index
    %95 = memref.load %arg2[%c2_125, %c20_126] : memref<3x27xf32, #tpu.memory_space<smem>>
    %c2_127 = arith.constant 2 : index
    %c21_128 = arith.constant 21 : index
    %96 = memref.load %arg2[%c2_127, %c21_128] : memref<3x27xf32, #tpu.memory_space<smem>>
    %c2_129 = arith.constant 2 : index
    %c22_130 = arith.constant 22 : index
    %97 = memref.load %arg2[%c2_129, %c22_130] : memref<3x27xf32, #tpu.memory_space<smem>>
    %c2_131 = arith.constant 2 : index
    %c23_132 = arith.constant 23 : index
    %98 = memref.load %arg2[%c2_131, %c23_132] : memref<3x27xf32, #tpu.memory_space<smem>>
    %c2_133 = arith.constant 2 : index
    %c24_134 = arith.constant 24 : index
    %99 = memref.load %arg2[%c2_133, %c24_134] : memref<3x27xf32, #tpu.memory_space<smem>>
    %c2_135 = arith.constant 2 : index
    %c25_136 = arith.constant 25 : index
    %100 = memref.load %arg2[%c2_135, %c25_136] : memref<3x27xf32, #tpu.memory_space<smem>>
    %c2_137 = arith.constant 2 : index
    %c26_138 = arith.constant 26 : index
    %101 = memref.load %arg2[%c2_137, %c26_138] : memref<3x27xf32, #tpu.memory_space<smem>>
    %c0_139 = arith.constant 0 : index
    %c0_140 = arith.constant 0 : index
    %c0_141 = arith.constant 0 : index
    %102 = vector.load %arg1[%c0_139, %c0_140, %c0_141] : memref<2x8x128xf32, #tpu.memory_space<vmem>>, vector<1x8x128xf32>
    %103 = vector.shape_cast %102 : vector<1x8x128xf32> to vector<8x128xf32>
    %c121_i32 = arith.constant 121 : i32
    %104 = tpu.dynamic_rotate %103 by %c121_i32 dim 1 : vector<8x128xf32>, i32 -> vector<8x128xf32>
    %c1_i32_142 = arith.constant 1 : i32
    %105 = tpu.dynamic_rotate %103 by %c1_i32_142 dim 1 : vector<8x128xf32>, i32 -> vector<8x128xf32>
    %106 = arith.select %18, %104, %105 : vector<8x128xi1>, vector<8x128xf32>
    %c7_i32_143 = arith.constant 7 : i32
    %107 = tpu.dynamic_rotate %103 by %c7_i32_143 dim 1 : vector<8x128xf32>, i32 -> vector<8x128xf32>
    %c127_i32 = arith.constant 127 : i32
    %108 = tpu.dynamic_rotate %103 by %c127_i32 dim 1 : vector<8x128xf32>, i32 -> vector<8x128xf32>
    %109 = arith.select %20, %107, %108 : vector<8x128xi1>, vector<8x128xf32>
    %c8_i32_144 = arith.constant 8 : i32
    %110 = tpu.dynamic_rotate %106 by %c8_i32_144 dim 1 : vector<8x128xf32>, i32 -> vector<8x128xf32>
    %111 = vector.broadcast %21 : f32 to vector<8x128xf32>
    %112 = arith.mulf %111, %110 : vector<8x128xf32>
    %113 = vector.broadcast %30 : f32 to vector<8x128xf32>
    %114 = arith.mulf %113, %110 : vector<8x128xf32>
    %115 = vector.broadcast %39 : f32 to vector<8x128xf32>
    %116 = arith.mulf %115, %110 : vector<8x128xf32>
    %117 = vector.broadcast %48 : f32 to vector<8x128xf32>
    %118 = arith.mulf %117, %110 : vector<8x128xf32>
    %119 = vector.broadcast %57 : f32 to vector<8x128xf32>
    %120 = arith.mulf %119, %110 : vector<8x128xf32>
    %121 = vector.broadcast %66 : f32 to vector<8x128xf32>
    %122 = arith.mulf %121, %110 : vector<8x128xf32>
    %123 = vector.broadcast %75 : f32 to vector<8x128xf32>
    %124 = arith.mulf %123, %110 : vector<8x128xf32>
    %125 = vector.broadcast %84 : f32 to vector<8x128xf32>
    %126 = arith.mulf %125, %110 : vector<8x128xf32>
    %127 = vector.broadcast %93 : f32 to vector<8x128xf32>
    %128 = arith.mulf %127, %110 : vector<8x128xf32>
    %c8_i32_145 = arith.constant 8 : i32
    %129 = tpu.dynamic_rotate %103 by %c8_i32_145 dim 1 : vector<8x128xf32>, i32 -> vector<8x128xf32>
    %130 = vector.broadcast %22 : f32 to vector<8x128xf32>
    %131 = arith.mulf %130, %129 : vector<8x128xf32>
    %132 = arith.addf %112, %131 : vector<8x128xf32>
    %133 = vector.broadcast %31 : f32 to vector<8x128xf32>
    %134 = arith.mulf %133, %129 : vector<8x128xf32>
    %135 = arith.addf %114, %134 : vector<8x128xf32>
    %136 = vector.broadcast %40 : f32 to vector<8x128xf32>
    %137 = arith.mulf %136, %129 : vector<8x128xf32>
    %138 = arith.addf %116, %137 : vector<8x128xf32>
    %139 = vector.broadcast %49 : f32 to vector<8x128xf32>
    %140 = arith.mulf %139, %129 : vector<8x128xf32>
    %141 = arith.addf %118, %140 : vector<8x128xf32>
    %142 = vector.broadcast %58 : f32 to vector<8x128xf32>
    %143 = arith.mulf %142, %129 : vector<8x128xf32>
    %144 = arith.addf %120, %143 : vector<8x128xf32>
    %145 = vector.broadcast %67 : f32 to vector<8x128xf32>
    %146 = arith.mulf %145, %129 : vector<8x128xf32>
    %147 = arith.addf %122, %146 : vector<8x128xf32>
    %148 = vector.broadcast %76 : f32 to vector<8x128xf32>
    %149 = arith.mulf %148, %129 : vector<8x128xf32>
    %150 = arith.addf %124, %149 : vector<8x128xf32>
    %151 = vector.broadcast %85 : f32 to vector<8x128xf32>
    %152 = arith.mulf %151, %129 : vector<8x128xf32>
    %153 = arith.addf %126, %152 : vector<8x128xf32>
    %154 = vector.broadcast %94 : f32 to vector<8x128xf32>
    %155 = arith.mulf %154, %129 : vector<8x128xf32>
    %156 = arith.addf %128, %155 : vector<8x128xf32>
    %c8_i32_146 = arith.constant 8 : i32
    %157 = tpu.dynamic_rotate %109 by %c8_i32_146 dim 1 : vector<8x128xf32>, i32 -> vector<8x128xf32>
    %158 = vector.broadcast %23 : f32 to vector<8x128xf32>
    %159 = arith.mulf %158, %157 : vector<8x128xf32>
    %160 = arith.addf %132, %159 : vector<8x128xf32>
    %161 = vector.broadcast %32 : f32 to vector<8x128xf32>
    %162 = arith.mulf %161, %157 : vector<8x128xf32>
    %163 = arith.addf %135, %162 : vector<8x128xf32>
    %164 = vector.broadcast %41 : f32 to vector<8x128xf32>
    %165 = arith.mulf %164, %157 : vector<8x128xf32>
    %166 = arith.addf %138, %165 : vector<8x128xf32>
    %167 = vector.broadcast %50 : f32 to vector<8x128xf32>
    %168 = arith.mulf %167, %157 : vector<8x128xf32>
    %169 = arith.addf %141, %168 : vector<8x128xf32>
    %170 = vector.broadcast %59 : f32 to vector<8x128xf32>
    %171 = arith.mulf %170, %157 : vector<8x128xf32>
    %172 = arith.addf %144, %171 : vector<8x128xf32>
    %173 = vector.broadcast %68 : f32 to vector<8x128xf32>
    %174 = arith.mulf %173, %157 : vector<8x128xf32>
    %175 = arith.addf %147, %174 : vector<8x128xf32>
    %176 = vector.broadcast %77 : f32 to vector<8x128xf32>
    %177 = arith.mulf %176, %157 : vector<8x128xf32>
    %178 = arith.addf %150, %177 : vector<8x128xf32>
    %179 = vector.broadcast %86 : f32 to vector<8x128xf32>
    %180 = arith.mulf %179, %157 : vector<8x128xf32>
    %181 = arith.addf %153, %180 : vector<8x128xf32>
    %182 = vector.broadcast %95 : f32 to vector<8x128xf32>
    %183 = arith.mulf %182, %157 : vector<8x128xf32>
    %184 = arith.addf %156, %183 : vector<8x128xf32>
    %185 = vector.broadcast %24 : f32 to vector<8x128xf32>
    %186 = arith.mulf %185, %106 : vector<8x128xf32>
    %187 = arith.addf %160, %186 : vector<8x128xf32>
    %188 = vector.broadcast %33 : f32 to vector<8x128xf32>
    %189 = arith.mulf %188, %106 : vector<8x128xf32>
    %190 = arith.addf %163, %189 : vector<8x128xf32>
    %191 = vector.broadcast %42 : f32 to vector<8x128xf32>
    %192 = arith.mulf %191, %106 : vector<8x128xf32>
    %193 = arith.addf %166, %192 : vector<8x128xf32>
    %194 = vector.broadcast %51 : f32 to vector<8x128xf32>
    %195 = arith.mulf %194, %106 : vector<8x128xf32>
    %196 = arith.addf %169, %195 : vector<8x128xf32>
    %197 = vector.broadcast %60 : f32 to vector<8x128xf32>
    %198 = arith.mulf %197, %106 : vector<8x128xf32>
    %199 = arith.addf %172, %198 : vector<8x128xf32>
    %200 = vector.broadcast %69 : f32 to vector<8x128xf32>
    %201 = arith.mulf %200, %106 : vector<8x128xf32>
    %202 = arith.addf %175, %201 : vector<8x128xf32>
    %203 = vector.broadcast %78 : f32 to vector<8x128xf32>
    %204 = arith.mulf %203, %106 : vector<8x128xf32>
    %205 = arith.addf %178, %204 : vector<8x128xf32>
    %206 = vector.broadcast %87 : f32 to vector<8x128xf32>
    %207 = arith.mulf %206, %106 : vector<8x128xf32>
    %208 = arith.addf %181, %207 : vector<8x128xf32>
    %209 = vector.broadcast %96 : f32 to vector<8x128xf32>
    %210 = arith.mulf %209, %106 : vector<8x128xf32>
    %211 = arith.addf %184, %210 : vector<8x128xf32>
    %212 = vector.broadcast %25 : f32 to vector<8x128xf32>
    %213 = arith.mulf %212, %103 : vector<8x128xf32>
    %214 = arith.addf %187, %213 : vector<8x128xf32>
    %215 = vector.broadcast %34 : f32 to vector<8x128xf32>
    %216 = arith.mulf %215, %103 : vector<8x128xf32>
    %217 = arith.addf %190, %216 : vector<8x128xf32>
    %218 = vector.broadcast %43 : f32 to vector<8x128xf32>
    %219 = arith.mulf %218, %103 : vector<8x128xf32>
    %220 = arith.addf %193, %219 : vector<8x128xf32>
    %221 = vector.broadcast %52 : f32 to vector<8x128xf32>
    %222 = arith.mulf %221, %103 : vector<8x128xf32>
    %223 = arith.addf %196, %222 : vector<8x128xf32>
    %224 = vector.broadcast %61 : f32 to vector<8x128xf32>
    %225 = arith.mulf %224, %103 : vector<8x128xf32>
    %226 = arith.addf %199, %225 : vector<8x128xf32>
    %227 = vector.broadcast %70 : f32 to vector<8x128xf32>
    %228 = arith.mulf %227, %103 : vector<8x128xf32>
    %229 = arith.addf %202, %228 : vector<8x128xf32>
    %230 = vector.broadcast %79 : f32 to vector<8x128xf32>
    %231 = arith.mulf %230, %103 : vector<8x128xf32>
    %232 = arith.addf %205, %231 : vector<8x128xf32>
    %233 = vector.broadcast %88 : f32 to vector<8x128xf32>
    %234 = arith.mulf %233, %103 : vector<8x128xf32>
    %235 = arith.addf %208, %234 : vector<8x128xf32>
    %236 = vector.broadcast %97 : f32 to vector<8x128xf32>
    %237 = arith.mulf %236, %103 : vector<8x128xf32>
    %238 = arith.addf %211, %237 : vector<8x128xf32>
    %239 = vector.broadcast %26 : f32 to vector<8x128xf32>
    %240 = arith.mulf %239, %109 : vector<8x128xf32>
    %241 = arith.addf %214, %240 : vector<8x128xf32>
    %242 = vector.broadcast %35 : f32 to vector<8x128xf32>
    %243 = arith.mulf %242, %109 : vector<8x128xf32>
    %244 = arith.addf %217, %243 : vector<8x128xf32>
    %245 = vector.broadcast %44 : f32 to vector<8x128xf32>
    %246 = arith.mulf %245, %109 : vector<8x128xf32>
    %247 = arith.addf %220, %246 : vector<8x128xf32>
    %248 = vector.broadcast %53 : f32 to vector<8x128xf32>
    %249 = arith.mulf %248, %109 : vector<8x128xf32>
    %250 = arith.addf %223, %249 : vector<8x128xf32>
    %251 = vector.broadcast %62 : f32 to vector<8x128xf32>
    %252 = arith.mulf %251, %109 : vector<8x128xf32>
    %253 = arith.addf %226, %252 : vector<8x128xf32>
    %254 = vector.broadcast %71 : f32 to vector<8x128xf32>
    %255 = arith.mulf %254, %109 : vector<8x128xf32>
    %256 = arith.addf %229, %255 : vector<8x128xf32>
    %257 = vector.broadcast %80 : f32 to vector<8x128xf32>
    %258 = arith.mulf %257, %109 : vector<8x128xf32>
    %259 = arith.addf %232, %258 : vector<8x128xf32>
    %260 = vector.broadcast %89 : f32 to vector<8x128xf32>
    %261 = arith.mulf %260, %109 : vector<8x128xf32>
    %262 = arith.addf %235, %261 : vector<8x128xf32>
    %263 = vector.broadcast %98 : f32 to vector<8x128xf32>
    %264 = arith.mulf %263, %109 : vector<8x128xf32>
    %265 = arith.addf %238, %264 : vector<8x128xf32>
    %c120_i32 = arith.constant 120 : i32
    %266 = tpu.dynamic_rotate %106 by %c120_i32 dim 1 : vector<8x128xf32>, i32 -> vector<8x128xf32>
    %267 = vector.broadcast %27 : f32 to vector<8x128xf32>
    %268 = arith.mulf %267, %266 : vector<8x128xf32>
    %269 = arith.addf %241, %268 : vector<8x128xf32>
    %270 = vector.broadcast %36 : f32 to vector<8x128xf32>
    %271 = arith.mulf %270, %266 : vector<8x128xf32>
    %272 = arith.addf %244, %271 : vector<8x128xf32>
    %273 = vector.broadcast %45 : f32 to vector<8x128xf32>
    %274 = arith.mulf %273, %266 : vector<8x128xf32>
    %275 = arith.addf %247, %274 : vector<8x128xf32>
    %276 = vector.broadcast %54 : f32 to vector<8x128xf32>
    %277 = arith.mulf %276, %266 : vector<8x128xf32>
    %278 = arith.addf %250, %277 : vector<8x128xf32>
    %279 = vector.broadcast %63 : f32 to vector<8x128xf32>
    %280 = arith.mulf %279, %266 : vector<8x128xf32>
    %281 = arith.addf %253, %280 : vector<8x128xf32>
    %282 = vector.broadcast %72 : f32 to vector<8x128xf32>
    %283 = arith.mulf %282, %266 : vector<8x128xf32>
    %284 = arith.addf %256, %283 : vector<8x128xf32>
    %285 = vector.broadcast %81 : f32 to vector<8x128xf32>
    %286 = arith.mulf %285, %266 : vector<8x128xf32>
    %287 = arith.addf %259, %286 : vector<8x128xf32>
    %288 = vector.broadcast %90 : f32 to vector<8x128xf32>
    %289 = arith.mulf %288, %266 : vector<8x128xf32>
    %290 = arith.addf %262, %289 : vector<8x128xf32>
    %291 = vector.broadcast %99 : f32 to vector<8x128xf32>
    %292 = arith.mulf %291, %266 : vector<8x128xf32>
    %293 = arith.addf %265, %292 : vector<8x128xf32>
    %c120_i32_147 = arith.constant 120 : i32
    %294 = tpu.dynamic_rotate %103 by %c120_i32_147 dim 1 : vector<8x128xf32>, i32 -> vector<8x128xf32>
    %295 = vector.broadcast %28 : f32 to vector<8x128xf32>
    %296 = arith.mulf %295, %294 : vector<8x128xf32>
    %297 = arith.addf %269, %296 : vector<8x128xf32>
    %298 = vector.broadcast %37 : f32 to vector<8x128xf32>
    %299 = arith.mulf %298, %294 : vector<8x128xf32>
    %300 = arith.addf %272, %299 : vector<8x128xf32>
    %301 = vector.broadcast %46 : f32 to vector<8x128xf32>
    %302 = arith.mulf %301, %294 : vector<8x128xf32>
    %303 = arith.addf %275, %302 : vector<8x128xf32>
    %304 = vector.broadcast %55 : f32 to vector<8x128xf32>
    %305 = arith.mulf %304, %294 : vector<8x128xf32>
    %306 = arith.addf %278, %305 : vector<8x128xf32>
    %307 = vector.broadcast %64 : f32 to vector<8x128xf32>
    %308 = arith.mulf %307, %294 : vector<8x128xf32>
    %309 = arith.addf %281, %308 : vector<8x128xf32>
    %310 = vector.broadcast %73 : f32 to vector<8x128xf32>
    %311 = arith.mulf %310, %294 : vector<8x128xf32>
    %312 = arith.addf %284, %311 : vector<8x128xf32>
    %313 = vector.broadcast %82 : f32 to vector<8x128xf32>
    %314 = arith.mulf %313, %294 : vector<8x128xf32>
    %315 = arith.addf %287, %314 : vector<8x128xf32>
    %316 = vector.broadcast %91 : f32 to vector<8x128xf32>
    %317 = arith.mulf %316, %294 : vector<8x128xf32>
    %318 = arith.addf %290, %317 : vector<8x128xf32>
    %319 = vector.broadcast %100 : f32 to vector<8x128xf32>
    %320 = arith.mulf %319, %294 : vector<8x128xf32>
    %321 = arith.addf %293, %320 : vector<8x128xf32>
    %c120_i32_148 = arith.constant 120 : i32
    %322 = tpu.dynamic_rotate %109 by %c120_i32_148 dim 1 : vector<8x128xf32>, i32 -> vector<8x128xf32>
    %323 = vector.broadcast %29 : f32 to vector<8x128xf32>
    %324 = arith.mulf %323, %322 : vector<8x128xf32>
    %325 = arith.addf %297, %324 : vector<8x128xf32>
    %326 = vector.broadcast %38 : f32 to vector<8x128xf32>
    %327 = arith.mulf %326, %322 : vector<8x128xf32>
    %328 = arith.addf %300, %327 : vector<8x128xf32>
    %329 = vector.broadcast %47 : f32 to vector<8x128xf32>
    %330 = arith.mulf %329, %322 : vector<8x128xf32>
    %331 = arith.addf %303, %330 : vector<8x128xf32>
    %332 = vector.broadcast %56 : f32 to vector<8x128xf32>
    %333 = arith.mulf %332, %322 : vector<8x128xf32>
    %334 = arith.addf %306, %333 : vector<8x128xf32>
    %335 = vector.broadcast %65 : f32 to vector<8x128xf32>
    %336 = arith.mulf %335, %322 : vector<8x128xf32>
    %337 = arith.addf %309, %336 : vector<8x128xf32>
    %338 = vector.broadcast %74 : f32 to vector<8x128xf32>
    %339 = arith.mulf %338, %322 : vector<8x128xf32>
    %340 = arith.addf %312, %339 : vector<8x128xf32>
    %341 = vector.broadcast %83 : f32 to vector<8x128xf32>
    %342 = arith.mulf %341, %322 : vector<8x128xf32>
    %343 = arith.addf %315, %342 : vector<8x128xf32>
    %344 = vector.broadcast %92 : f32 to vector<8x128xf32>
    %345 = arith.mulf %344, %322 : vector<8x128xf32>
    %346 = arith.addf %318, %345 : vector<8x128xf32>
    %347 = vector.broadcast %101 : f32 to vector<8x128xf32>
    %348 = arith.mulf %347, %322 : vector<8x128xf32>
    %349 = arith.addf %321, %348 : vector<8x128xf32>
    %c1_i32_149 = arith.constant 1 : i32
    %350 = tpu.dynamic_rotate %325 by %c1_i32_149 dim 0 : vector<8x128xf32>, i32 -> vector<8x128xf32>
    %351 = arith.addf %328, %350 : vector<8x128xf32>
    %c7_i32_150 = arith.constant 7 : i32
    %352 = tpu.dynamic_rotate %331 by %c7_i32_150 dim 0 : vector<8x128xf32>, i32 -> vector<8x128xf32>
    %353 = arith.addf %351, %352 : vector<8x128xf32>
    %c0_151 = arith.constant 0 : index
    %c0_152 = arith.constant 0 : index
    %c0_153 = arith.constant 0 : index
    %c0_154 = arith.constant 0 : index
    %354 = vector.load %arg3[%c0_151, %c0_152, %c0_153, %c0_154] : memref<2x3x8x128xf32, #tpu.memory_space<vmem>>, vector<1x1x8x128xf32>
    %355 = vector.shape_cast %354 : vector<1x1x8x128xf32> to vector<8x128xf32>
    %356 = vector.shape_cast %353 : vector<8x128xf32> to vector<1x1x8x128xf32>
    tpu.vector_store %arg3[%c0_151, %c0_152, %c0_153, %c0_154], %356 {strides = array<i32>} : memref<2x3x8x128xf32, #tpu.memory_space<vmem>>, vector<1x1x8x128xf32>,
    %c1_i32_155 = arith.constant 1 : i32
    %357 = tpu.dynamic_rotate %334 by %c1_i32_155 dim 0 : vector<8x128xf32>, i32 -> vector<8x128xf32>
    %358 = arith.addf %337, %357 : vector<8x128xf32>
    %c7_i32_156 = arith.constant 7 : i32
    %359 = tpu.dynamic_rotate %340 by %c7_i32_156 dim 0 : vector<8x128xf32>, i32 -> vector<8x128xf32>
    %360 = arith.addf %358, %359 : vector<8x128xf32>
    %c0_157 = arith.constant 0 : index
    %c1_158 = arith.constant 1 : index
    %c0_159 = arith.constant 0 : index
    %c0_160 = arith.constant 0 : index
    %361 = vector.load %arg3[%c0_157, %c1_158, %c0_159, %c0_160] : memref<2x3x8x128xf32, #tpu.memory_space<vmem>>, vector<1x1x8x128xf32>
    %362 = vector.shape_cast %361 : vector<1x1x8x128xf32> to vector<8x128xf32>
    %363 = vector.shape_cast %360 : vector<8x128xf32> to vector<1x1x8x128xf32>
    tpu.vector_store %arg3[%c0_157, %c1_158, %c0_159, %c0_160], %363 {strides = array<i32>} : memref<2x3x8x128xf32, #tpu.memory_space<vmem>>, vector<1x1x8x128xf32>,
    %c1_i32_161 = arith.constant 1 : i32
    %364 = tpu.dynamic_rotate %343 by %c1_i32_161 dim 0 : vector<8x128xf32>, i32 -> vector<8x128xf32>
    %365 = arith.addf %346, %364 : vector<8x128xf32>
    %c7_i32_162 = arith.constant 7 : i32
    %366 = tpu.dynamic_rotate %349 by %c7_i32_162 dim 0 : vector<8x128xf32>, i32 -> vector<8x128xf32>
    %367 = arith.addf %365, %366 : vector<8x128xf32>
    %c0_163 = arith.constant 0 : index
    %c2_164 = arith.constant 2 : index
    %c0_165 = arith.constant 0 : index
    %c0_166 = arith.constant 0 : index
    %368 = vector.load %arg3[%c0_163, %c2_164, %c0_165, %c0_166] : memref<2x3x8x128xf32, #tpu.memory_space<vmem>>, vector<1x1x8x128xf32>
    %369 = vector.shape_cast %368 : vector<1x1x8x128xf32> to vector<8x128xf32>
    %370 = vector.shape_cast %367 : vector<8x128xf32> to vector<1x1x8x128xf32>
    tpu.vector_store %arg3[%c0_163, %c2_164, %c0_165, %c0_166], %370 {strides = array<i32>} : memref<2x3x8x128xf32, #tpu.memory_space<vmem>>, vector<1x1x8x128xf32>,
    %c1_167 = arith.constant 1 : index
    %c0_168 = arith.constant 0 : index
    %c0_169 = arith.constant 0 : index
    %371 = vector.load %arg1[%c1_167, %c0_168, %c0_169] : memref<2x8x128xf32, #tpu.memory_space<vmem>>, vector<1x8x128xf32>
    %372 = vector.shape_cast %371 : vector<1x8x128xf32> to vector<8x128xf32>
    %c121_i32_170 = arith.constant 121 : i32
    %373 = tpu.dynamic_rotate %372 by %c121_i32_170 dim 1 : vector<8x128xf32>, i32 -> vector<8x128xf32>
    %c1_i32_171 = arith.constant 1 : i32
    %374 = tpu.dynamic_rotate %372 by %c1_i32_171 dim 1 : vector<8x128xf32>, i32 -> vector<8x128xf32>
    %375 = arith.select %18, %373, %374 : vector<8x128xi1>, vector<8x128xf32>
    %c7_i32_172 = arith.constant 7 : i32
    %376 = tpu.dynamic_rotate %372 by %c7_i32_172 dim 1 : vector<8x128xf32>, i32 -> vector<8x128xf32>
    %c127_i32_173 = arith.constant 127 : i32
    %377 = tpu.dynamic_rotate %372 by %c127_i32_173 dim 1 : vector<8x128xf32>, i32 -> vector<8x128xf32>
    %378 = arith.select %20, %376, %377 : vector<8x128xi1>, vector<8x128xf32>
    %c8_i32_174 = arith.constant 8 : i32
    %379 = tpu.dynamic_rotate %375 by %c8_i32_174 dim 1 : vector<8x128xf32>, i32 -> vector<8x128xf32>
    %380 = vector.broadcast %21 : f32 to vector<8x128xf32>
    %381 = arith.mulf %380, %379 : vector<8x128xf32>
    %382 = vector.broadcast %30 : f32 to vector<8x128xf32>
    %383 = arith.mulf %382, %379 : vector<8x128xf32>
    %384 = vector.broadcast %39 : f32 to vector<8x128xf32>
    %385 = arith.mulf %384, %379 : vector<8x128xf32>
    %386 = vector.broadcast %48 : f32 to vector<8x128xf32>
    %387 = arith.mulf %386, %379 : vector<8x128xf32>
    %388 = vector.broadcast %57 : f32 to vector<8x128xf32>
    %389 = arith.mulf %388, %379 : vector<8x128xf32>
    %390 = vector.broadcast %66 : f32 to vector<8x128xf32>
    %391 = arith.mulf %390, %379 : vector<8x128xf32>
    %392 = vector.broadcast %75 : f32 to vector<8x128xf32>
    %393 = arith.mulf %392, %379 : vector<8x128xf32>
    %394 = vector.broadcast %84 : f32 to vector<8x128xf32>
    %395 = arith.mulf %394, %379 : vector<8x128xf32>
    %396 = vector.broadcast %93 : f32 to vector<8x128xf32>
    %397 = arith.mulf %396, %379 : vector<8x128xf32>
    %c8_i32_175 = arith.constant 8 : i32
    %398 = tpu.dynamic_rotate %372 by %c8_i32_175 dim 1 : vector<8x128xf32>, i32 -> vector<8x128xf32>
    %399 = vector.broadcast %22 : f32 to vector<8x128xf32>
    %400 = arith.mulf %399, %398 : vector<8x128xf32>
    %401 = arith.addf %381, %400 : vector<8x128xf32>
    %402 = vector.broadcast %31 : f32 to vector<8x128xf32>
    %403 = arith.mulf %402, %398 : vector<8x128xf32>
    %404 = arith.addf %383, %403 : vector<8x128xf32>
    %405 = vector.broadcast %40 : f32 to vector<8x128xf32>
    %406 = arith.mulf %405, %398 : vector<8x128xf32>
    %407 = arith.addf %385, %406 : vector<8x128xf32>
    %408 = vector.broadcast %49 : f32 to vector<8x128xf32>
    %409 = arith.mulf %408, %398 : vector<8x128xf32>
    %410 = arith.addf %387, %409 : vector<8x128xf32>
    %411 = vector.broadcast %58 : f32 to vector<8x128xf32>
    %412 = arith.mulf %411, %398 : vector<8x128xf32>
    %413 = arith.addf %389, %412 : vector<8x128xf32>
    %414 = vector.broadcast %67 : f32 to vector<8x128xf32>
    %415 = arith.mulf %414, %398 : vector<8x128xf32>
    %416 = arith.addf %391, %415 : vector<8x128xf32>
    %417 = vector.broadcast %76 : f32 to vector<8x128xf32>
    %418 = arith.mulf %417, %398 : vector<8x128xf32>
    %419 = arith.addf %393, %418 : vector<8x128xf32>
    %420 = vector.broadcast %85 : f32 to vector<8x128xf32>
    %421 = arith.mulf %420, %398 : vector<8x128xf32>
    %422 = arith.addf %395, %421 : vector<8x128xf32>
    %423 = vector.broadcast %94 : f32 to vector<8x128xf32>
    %424 = arith.mulf %423, %398 : vector<8x128xf32>
    %425 = arith.addf %397, %424 : vector<8x128xf32>
    %c8_i32_176 = arith.constant 8 : i32
    %426 = tpu.dynamic_rotate %378 by %c8_i32_176 dim 1 : vector<8x128xf32>, i32 -> vector<8x128xf32>
    %427 = vector.broadcast %23 : f32 to vector<8x128xf32>
    %428 = arith.mulf %427, %426 : vector<8x128xf32>
    %429 = arith.addf %401, %428 : vector<8x128xf32>
    %430 = vector.broadcast %32 : f32 to vector<8x128xf32>
    %431 = arith.mulf %430, %426 : vector<8x128xf32>
    %432 = arith.addf %404, %431 : vector<8x128xf32>
    %433 = vector.broadcast %41 : f32 to vector<8x128xf32>
    %434 = arith.mulf %433, %426 : vector<8x128xf32>
    %435 = arith.addf %407, %434 : vector<8x128xf32>
    %436 = vector.broadcast %50 : f32 to vector<8x128xf32>
    %437 = arith.mulf %436, %426 : vector<8x128xf32>
    %438 = arith.addf %410, %437 : vector<8x128xf32>
    %439 = vector.broadcast %59 : f32 to vector<8x128xf32>
    %440 = arith.mulf %439, %426 : vector<8x128xf32>
    %441 = arith.addf %413, %440 : vector<8x128xf32>
    %442 = vector.broadcast %68 : f32 to vector<8x128xf32>
    %443 = arith.mulf %442, %426 : vector<8x128xf32>
    %444 = arith.addf %416, %443 : vector<8x128xf32>
    %445 = vector.broadcast %77 : f32 to vector<8x128xf32>
    %446 = arith.mulf %445, %426 : vector<8x128xf32>
    %447 = arith.addf %419, %446 : vector<8x128xf32>
    %448 = vector.broadcast %86 : f32 to vector<8x128xf32>
    %449 = arith.mulf %448, %426 : vector<8x128xf32>
    %450 = arith.addf %422, %449 : vector<8x128xf32>
    %451 = vector.broadcast %95 : f32 to vector<8x128xf32>
    %452 = arith.mulf %451, %426 : vector<8x128xf32>
    %453 = arith.addf %425, %452 : vector<8x128xf32>
    %454 = vector.broadcast %24 : f32 to vector<8x128xf32>
    %455 = arith.mulf %454, %375 : vector<8x128xf32>
    %456 = arith.addf %429, %455 : vector<8x128xf32>
    %457 = vector.broadcast %33 : f32 to vector<8x128xf32>
    %458 = arith.mulf %457, %375 : vector<8x128xf32>
    %459 = arith.addf %432, %458 : vector<8x128xf32>
    %460 = vector.broadcast %42 : f32 to vector<8x128xf32>
    %461 = arith.mulf %460, %375 : vector<8x128xf32>
    %462 = arith.addf %435, %461 : vector<8x128xf32>
    %463 = vector.broadcast %51 : f32 to vector<8x128xf32>
    %464 = arith.mulf %463, %375 : vector<8x128xf32>
    %465 = arith.addf %438, %464 : vector<8x128xf32>
    %466 = vector.broadcast %60 : f32 to vector<8x128xf32>
    %467 = arith.mulf %466, %375 : vector<8x128xf32>
    %468 = arith.addf %441, %467 : vector<8x128xf32>
    %469 = vector.broadcast %69 : f32 to vector<8x128xf32>
    %470 = arith.mulf %469, %375 : vector<8x128xf32>
    %471 = arith.addf %444, %470 : vector<8x128xf32>
    %472 = vector.broadcast %78 : f32 to vector<8x128xf32>
    %473 = arith.mulf %472, %375 : vector<8x128xf32>
    %474 = arith.addf %447, %473 : vector<8x128xf32>
    %475 = vector.broadcast %87 : f32 to vector<8x128xf32>
    %476 = arith.mulf %475, %375 : vector<8x128xf32>
    %477 = arith.addf %450, %476 : vector<8x128xf32>
    %478 = vector.broadcast %96 : f32 to vector<8x128xf32>
    %479 = arith.mulf %478, %375 : vector<8x128xf32>
    %480 = arith.addf %453, %479 : vector<8x128xf32>
    %481 = vector.broadcast %25 : f32 to vector<8x128xf32>
    %482 = arith.mulf %481, %372 : vector<8x128xf32>
    %483 = arith.addf %456, %482 : vector<8x128xf32>
    %484 = vector.broadcast %34 : f32 to vector<8x128xf32>
    %485 = arith.mulf %484, %372 : vector<8x128xf32>
    %486 = arith.addf %459, %485 : vector<8x128xf32>
    %487 = vector.broadcast %43 : f32 to vector<8x128xf32>
    %488 = arith.mulf %487, %372 : vector<8x128xf32>
    %489 = arith.addf %462, %488 : vector<8x128xf32>
    %490 = vector.broadcast %52 : f32 to vector<8x128xf32>
    %491 = arith.mulf %490, %372 : vector<8x128xf32>
    %492 = arith.addf %465, %491 : vector<8x128xf32>
    %493 = vector.broadcast %61 : f32 to vector<8x128xf32>
    %494 = arith.mulf %493, %372 : vector<8x128xf32>
    %495 = arith.addf %468, %494 : vector<8x128xf32>
    %496 = vector.broadcast %70 : f32 to vector<8x128xf32>
    %497 = arith.mulf %496, %372 : vector<8x128xf32>
    %498 = arith.addf %471, %497 : vector<8x128xf32>
    %499 = vector.broadcast %79 : f32 to vector<8x128xf32>
    %500 = arith.mulf %499, %372 : vector<8x128xf32>
    %501 = arith.addf %474, %500 : vector<8x128xf32>
    %502 = vector.broadcast %88 : f32 to vector<8x128xf32>
    %503 = arith.mulf %502, %372 : vector<8x128xf32>
    %504 = arith.addf %477, %503 : vector<8x128xf32>
    %505 = vector.broadcast %97 : f32 to vector<8x128xf32>
    %506 = arith.mulf %505, %372 : vector<8x128xf32>
    %507 = arith.addf %480, %506 : vector<8x128xf32>
    %508 = vector.broadcast %26 : f32 to vector<8x128xf32>
    %509 = arith.mulf %508, %378 : vector<8x128xf32>
    %510 = arith.addf %483, %509 : vector<8x128xf32>
    %511 = vector.broadcast %35 : f32 to vector<8x128xf32>
    %512 = arith.mulf %511, %378 : vector<8x128xf32>
    %513 = arith.addf %486, %512 : vector<8x128xf32>
    %514 = vector.broadcast %44 : f32 to vector<8x128xf32>
    %515 = arith.mulf %514, %378 : vector<8x128xf32>
    %516 = arith.addf %489, %515 : vector<8x128xf32>
    %517 = vector.broadcast %53 : f32 to vector<8x128xf32>
    %518 = arith.mulf %517, %378 : vector<8x128xf32>
    %519 = arith.addf %492, %518 : vector<8x128xf32>
    %520 = vector.broadcast %62 : f32 to vector<8x128xf32>
    %521 = arith.mulf %520, %378 : vector<8x128xf32>
    %522 = arith.addf %495, %521 : vector<8x128xf32>
    %523 = vector.broadcast %71 : f32 to vector<8x128xf32>
    %524 = arith.mulf %523, %378 : vector<8x128xf32>
    %525 = arith.addf %498, %524 : vector<8x128xf32>
    %526 = vector.broadcast %80 : f32 to vector<8x128xf32>
    %527 = arith.mulf %526, %378 : vector<8x128xf32>
    %528 = arith.addf %501, %527 : vector<8x128xf32>
    %529 = vector.broadcast %89 : f32 to vector<8x128xf32>
    %530 = arith.mulf %529, %378 : vector<8x128xf32>
    %531 = arith.addf %504, %530 : vector<8x128xf32>
    %532 = vector.broadcast %98 : f32 to vector<8x128xf32>
    %533 = arith.mulf %532, %378 : vector<8x128xf32>
    %534 = arith.addf %507, %533 : vector<8x128xf32>
    %c120_i32_177 = arith.constant 120 : i32
    %535 = tpu.dynamic_rotate %375 by %c120_i32_177 dim 1 : vector<8x128xf32>, i32 -> vector<8x128xf32>
    %536 = vector.broadcast %27 : f32 to vector<8x128xf32>
    %537 = arith.mulf %536, %535 : vector<8x128xf32>
    %538 = arith.addf %510, %537 : vector<8x128xf32>
    %539 = vector.broadcast %36 : f32 to vector<8x128xf32>
    %540 = arith.mulf %539, %535 : vector<8x128xf32>
    %541 = arith.addf %513, %540 : vector<8x128xf32>
    %542 = vector.broadcast %45 : f32 to vector<8x128xf32>
    %543 = arith.mulf %542, %535 : vector<8x128xf32>
    %544 = arith.addf %516, %543 : vector<8x128xf32>
    %545 = vector.broadcast %54 : f32 to vector<8x128xf32>
    %546 = arith.mulf %545, %535 : vector<8x128xf32>
    %547 = arith.addf %519, %546 : vector<8x128xf32>
    %548 = vector.broadcast %63 : f32 to vector<8x128xf32>
    %549 = arith.mulf %548, %535 : vector<8x128xf32>
    %550 = arith.addf %522, %549 : vector<8x128xf32>
    %551 = vector.broadcast %72 : f32 to vector<8x128xf32>
    %552 = arith.mulf %551, %535 : vector<8x128xf32>
    %553 = arith.addf %525, %552 : vector<8x128xf32>
    %554 = vector.broadcast %81 : f32 to vector<8x128xf32>
    %555 = arith.mulf %554, %535 : vector<8x128xf32>
    %556 = arith.addf %528, %555 : vector<8x128xf32>
    %557 = vector.broadcast %90 : f32 to vector<8x128xf32>
    %558 = arith.mulf %557, %535 : vector<8x128xf32>
    %559 = arith.addf %531, %558 : vector<8x128xf32>
    %560 = vector.broadcast %99 : f32 to vector<8x128xf32>
    %561 = arith.mulf %560, %535 : vector<8x128xf32>
    %562 = arith.addf %534, %561 : vector<8x128xf32>
    %c120_i32_178 = arith.constant 120 : i32
    %563 = tpu.dynamic_rotate %372 by %c120_i32_178 dim 1 : vector<8x128xf32>, i32 -> vector<8x128xf32>
    %564 = vector.broadcast %28 : f32 to vector<8x128xf32>
    %565 = arith.mulf %564, %563 : vector<8x128xf32>
    %566 = arith.addf %538, %565 : vector<8x128xf32>
    %567 = vector.broadcast %37 : f32 to vector<8x128xf32>
    %568 = arith.mulf %567, %563 : vector<8x128xf32>
    %569 = arith.addf %541, %568 : vector<8x128xf32>
    %570 = vector.broadcast %46 : f32 to vector<8x128xf32>
    %571 = arith.mulf %570, %563 : vector<8x128xf32>
    %572 = arith.addf %544, %571 : vector<8x128xf32>
    %573 = vector.broadcast %55 : f32 to vector<8x128xf32>
    %574 = arith.mulf %573, %563 : vector<8x128xf32>
    %575 = arith.addf %547, %574 : vector<8x128xf32>
    %576 = vector.broadcast %64 : f32 to vector<8x128xf32>
    %577 = arith.mulf %576, %563 : vector<8x128xf32>
    %578 = arith.addf %550, %577 : vector<8x128xf32>
    %579 = vector.broadcast %73 : f32 to vector<8x128xf32>
    %580 = arith.mulf %579, %563 : vector<8x128xf32>
    %581 = arith.addf %553, %580 : vector<8x128xf32>
    %582 = vector.broadcast %82 : f32 to vector<8x128xf32>
    %583 = arith.mulf %582, %563 : vector<8x128xf32>
    %584 = arith.addf %556, %583 : vector<8x128xf32>
    %585 = vector.broadcast %91 : f32 to vector<8x128xf32>
    %586 = arith.mulf %585, %563 : vector<8x128xf32>
    %587 = arith.addf %559, %586 : vector<8x128xf32>
    %588 = vector.broadcast %100 : f32 to vector<8x128xf32>
    %589 = arith.mulf %588, %563 : vector<8x128xf32>
    %590 = arith.addf %562, %589 : vector<8x128xf32>
    %c120_i32_179 = arith.constant 120 : i32
    %591 = tpu.dynamic_rotate %378 by %c120_i32_179 dim 1 : vector<8x128xf32>, i32 -> vector<8x128xf32>
    %592 = vector.broadcast %29 : f32 to vector<8x128xf32>
    %593 = arith.mulf %592, %591 : vector<8x128xf32>
    %594 = arith.addf %566, %593 : vector<8x128xf32>
    %595 = vector.broadcast %38 : f32 to vector<8x128xf32>
    %596 = arith.mulf %595, %591 : vector<8x128xf32>
    %597 = arith.addf %569, %596 : vector<8x128xf32>
    %598 = vector.broadcast %47 : f32 to vector<8x128xf32>
    %599 = arith.mulf %598, %591 : vector<8x128xf32>
    %600 = arith.addf %572, %599 : vector<8x128xf32>
    %601 = vector.broadcast %56 : f32 to vector<8x128xf32>
    %602 = arith.mulf %601, %591 : vector<8x128xf32>
    %603 = arith.addf %575, %602 : vector<8x128xf32>
    %604 = vector.broadcast %65 : f32 to vector<8x128xf32>
    %605 = arith.mulf %604, %591 : vector<8x128xf32>
    %606 = arith.addf %578, %605 : vector<8x128xf32>
    %607 = vector.broadcast %74 : f32 to vector<8x128xf32>
    %608 = arith.mulf %607, %591 : vector<8x128xf32>
    %609 = arith.addf %581, %608 : vector<8x128xf32>
    %610 = vector.broadcast %83 : f32 to vector<8x128xf32>
    %611 = arith.mulf %610, %591 : vector<8x128xf32>
    %612 = arith.addf %584, %611 : vector<8x128xf32>
    %613 = vector.broadcast %92 : f32 to vector<8x128xf32>
    %614 = arith.mulf %613, %591 : vector<8x128xf32>
    %615 = arith.addf %587, %614 : vector<8x128xf32>
    %616 = vector.broadcast %101 : f32 to vector<8x128xf32>
    %617 = arith.mulf %616, %591 : vector<8x128xf32>
    %618 = arith.addf %590, %617 : vector<8x128xf32>
    %c1_i32_180 = arith.constant 1 : i32
    %619 = tpu.dynamic_rotate %594 by %c1_i32_180 dim 0 : vector<8x128xf32>, i32 -> vector<8x128xf32>
    %620 = arith.addf %597, %619 : vector<8x128xf32>
    %c7_i32_181 = arith.constant 7 : i32
    %621 = tpu.dynamic_rotate %600 by %c7_i32_181 dim 0 : vector<8x128xf32>, i32 -> vector<8x128xf32>
    %622 = arith.addf %620, %621 : vector<8x128xf32>
    %c1_182 = arith.constant 1 : index
    %c0_183 = arith.constant 0 : index
    %c0_184 = arith.constant 0 : index
    %c0_185 = arith.constant 0 : index
    %623 = vector.load %arg3[%c1_182, %c0_183, %c0_184, %c0_185] : memref<2x3x8x128xf32, #tpu.memory_space<vmem>>, vector<1x1x8x128xf32>
    %624 = vector.shape_cast %623 : vector<1x1x8x128xf32> to vector<8x128xf32>
    %625 = vector.shape_cast %622 : vector<8x128xf32> to vector<1x1x8x128xf32>
    tpu.vector_store %arg3[%c1_182, %c0_183, %c0_184, %c0_185], %625 {strides = array<i32>} : memref<2x3x8x128xf32, #tpu.memory_space<vmem>>, vector<1x1x8x128xf32>,
    %c1_i32_186 = arith.constant 1 : i32
    %626 = tpu.dynamic_rotate %603 by %c1_i32_186 dim 0 : vector<8x128xf32>, i32 -> vector<8x128xf32>
    %627 = arith.addf %606, %626 : vector<8x128xf32>
    %c7_i32_187 = arith.constant 7 : i32
    %628 = tpu.dynamic_rotate %609 by %c7_i32_187 dim 0 : vector<8x128xf32>, i32 -> vector<8x128xf32>
    %629 = arith.addf %627, %628 : vector<8x128xf32>
    %c1_188 = arith.constant 1 : index
    %c1_189 = arith.constant 1 : index
    %c0_190 = arith.constant 0 : index
    %c0_191 = arith.constant 0 : index
    %630 = vector.load %arg3[%c1_188, %c1_189, %c0_190, %c0_191] : memref<2x3x8x128xf32, #tpu.memory_space<vmem>>, vector<1x1x8x128xf32>
    %631 = vector.shape_cast %630 : vector<1x1x8x128xf32> to vector<8x128xf32>
    %632 = vector.shape_cast %629 : vector<8x128xf32> to vector<1x1x8x128xf32>
    tpu.vector_store %arg3[%c1_188, %c1_189, %c0_190, %c0_191], %632 {strides = array<i32>} : memref<2x3x8x128xf32, #tpu.memory_space<vmem>>, vector<1x1x8x128xf32>,
    %c1_i32_192 = arith.constant 1 : i32
    %633 = tpu.dynamic_rotate %612 by %c1_i32_192 dim 0 : vector<8x128xf32>, i32 -> vector<8x128xf32>
    %634 = arith.addf %615, %633 : vector<8x128xf32>
    %c7_i32_193 = arith.constant 7 : i32
    %635 = tpu.dynamic_rotate %618 by %c7_i32_193 dim 0 : vector<8x128xf32>, i32 -> vector<8x128xf32>
    %636 = arith.addf %634, %635 : vector<8x128xf32>
    %c1_194 = arith.constant 1 : index
    %c2_195 = arith.constant 2 : index
    %c0_196 = arith.constant 0 : index
    %c0_197 = arith.constant 0 : index
    %637 = vector.load %arg3[%c1_194, %c2_195, %c0_196, %c0_197] : memref<2x3x8x128xf32, #tpu.memory_space<vmem>>, vector<1x1x8x128xf32>
    %638 = vector.shape_cast %637 : vector<1x1x8x128xf32> to vector<8x128xf32>
    %639 = vector.shape_cast %636 : vector<8x128xf32> to vector<1x1x8x128xf32>
    tpu.vector_store %arg3[%c1_194, %c2_195, %c0_196, %c0_197], %639 {strides = array<i32>} : memref<2x3x8x128xf32, #tpu.memory_space<vmem>>, vector<1x1x8x128xf32>,
    return
  }
  func.func @transform_0(%arg0: i32) -> (i32, i32, i32) {
    %c0_i32 = arith.constant 0 : i32
    %c0_i32_0 = arith.constant 0 : i32
    %c0_i32_1 = arith.constant 0 : i32
    return %arg0, %c0_i32, %c0_i32_0 : i32, i32, i32
  }
  func.func @transform_1(%arg0: i32) -> (i32, i32) {
    %c0_i32 = arith.constant 0 : i32
    %c0_i32_0 = arith.constant 0 : i32
    %c0_i32_1 = arith.constant 0 : i32
    return %c0_i32, %c0_i32_0 : i32, i32
  }
  func.func @transform_2(%arg0: i32) -> (i32, i32, i32, i32) {
    %c0_i32 = arith.constant 0 : i32
    %c0_i32_0 = arith.constant 0 : i32
    %c0_i32_1 = arith.constant 0 : i32
    %c0_i32_2 = arith.constant 0 : i32
    return %arg0, %c0_i32, %c0_i32_0, %c0_i32_1 : i32, i32, i32, i32
  }
}

</mosaic_0001>

<llo_original>
// kernel: tpu_custom_call.1
$region0: #{tpu_custom_call.1}
  #allocation0 [shape = 'u32[]', space=smem, size = 0x4, offset = 0x4, fixed_abs, tag = 'smem constant byte address 0x4 - core index']
  #allocation1 [shape = 'u32[144,128]{1,0:T(1,128)}', space=vmem, size = 0x12000, scoped, tag = 'internal scratch']
  %s0 = inlined_call_operand.hbm [shape: f32[2,8,128], index: 0, kind: input, shape index: {}]
  %s1 = inlined_call_operand.hbm [shape: f32[3,27], index: 1, kind: input, shape index: {}]
  %s2 = inlined_call_operand.hbm [shape: f32[2,3,8,128], index: 2, kind: output, shape index: {}]
  %s3 = sld [smem:[#allocation0]]
  $region26: #{tpu_custom_call.1} parent=0
    _
  %s5 = ssub.s32 1, %s3
  %s6 = scalar_select 0, %s5, %s3
  $region1: #{tpu_custom_call.1} parent=0
    #allocation2 [shape = 'u8[8192]{0}', space=vmem, size = 0x2000, scoped, tag = 'input window, operand 0, single buffered']
    #allocation3 [shape = 's32[1]{0}', space=sflag, size = 0x4, scoped, tag = 'scoped memory for tpu_custom_call.1']
    #allocation4 [shape = 's32[1]{0}', space=sflag, size = 0x4, scoped, tag = 'scoped memory for tpu_custom_call.1']
    #allocation5 [shape = 's32[1]{0}', space=sflag, size = 0x4, scoped, tag = 'scoped memory for tpu_custom_call.1']
    #allocation6 [shape = 'u8[2048]{0}', space=smem, size = 0x800, scoped, tag = 'input window, operand 1, single buffered']
    #allocation7 [shape = 'u8[24576]{0}', space=vmem, size = 0x6000, scoped, tag = 'output window, operand 0, single buffered']
    %7 = vsyncpa [#allocation3], 0
    %8 = vsyncpa [#allocation5], 0
    %9 = vsyncpa [#allocation4], 0
    // Predicated region
    $region2: #{tpu_custom_call.1} parent=1 // pred_check
      _
    $region3: #{tpu_custom_call.1} parent=1 // pred_check_branch
      %11 = sbr.rel (0) target = $region5
    $region4: #{tpu_custom_call.1} parent=1 // pred_region
      %s13 = ssub.s32 256, 256
      %14 = vsyncadd [#allocation3], %s13
      %s15 = sshll.u32 [#allocation2], 4
      %s16 = int_to_ptr.vmem [resolvable:$true] %s15
      %21 = dma.hbm_to_vmem [thread:$0]  %s0, 256, %s16, [#allocation3], 128, 128, 8
    $region5: #{tpu_custom_call.1} parent=1 // pred_fallthru
      _
    // Predicated region
    $region6: #{tpu_custom_call.1} parent=1 // pred_check
      _
    $region7: #{tpu_custom_call.1} parent=1 // pred_check_branch
      %23 = sbr.rel (0) target = $region9
    $region8: #{tpu_custom_call.1} parent=1 // pred_region
      %s25 = ssub.s32 64, 64
      %26 = vsyncadd [#allocation5], %s25
      %29 = dma.hbm_to_smem %s1, 64, [#allocation6], [#allocation5]
    $region9: #{tpu_custom_call.1} parent=1 // pred_fallthru
      _
    // Predicated region
    $region10: #{tpu_custom_call.1} parent=1 // pred_check
      _
    $region11: #{tpu_custom_call.1} parent=1 // pred_check_branch
      %31 = sbr.rel (0) target = $region13
    $region12: #{tpu_custom_call.1} parent=1 // pred_region
      %32 = dma.done [#allocation3], 256
    $region13: #{tpu_custom_call.1} parent=1 // pred_fallthru
      _
    // Predicated region
    $region14: #{tpu_custom_call.1} parent=1 // pred_check
      _
    $region15: #{tpu_custom_call.1} parent=1 // pred_check_branch
      %34 = sbr.rel (0) target = $region17
    $region16: #{tpu_custom_call.1} parent=1 // pred_region
      %35 = dma.done [#allocation5], 64
    $region17: #{tpu_custom_call.1} parent=1 // pred_fallthru
      _
    %36 = sfence
    %v37 = vlaneseq
    %v38 = vand.u32 %v37, 127
    %vm39 = vcmp.lt.s32.totalorder %v38, 0
    %v40 = vsub.s32 0, %v38
    %v41 = vsel %vm39, %v40, %v38
    %v42 = vshrl.u32 %v41, 3
    %v43 = vand.u32 %v41, 7
    %v44 = vsub.s32 0, %v43
    %v45 = vsel %vm39, %v44, %v43
    %vm46 = vcmp.ne.s32.totalorder %v45, 0
    %vm47 = vcmp.lt.s32.totalorder %v45, 0
    %vm48 = vmand %vm47, %vm46
    %v49 = vadd.s32 %v45, 8
    %v50 = vsel %vm48, %v49, %v45
    %vm51 = vcmp.eq.s32.totalorder %v50, 0
    %vm52 = vcmp.eq.s32.totalorder %v50, 7
    %s53 = sld [smem:[#allocation6]]
    %s54 = sld [smem:[#allocation6 + $0x1]]
    %s55 = sld [smem:[#allocation6 + $0x2]]
    %s56 = sld [smem:[#allocation6 + $0x3]]
    %s57 = sld [smem:[#allocation6 + $0x4]]
    %s58 = sld [smem:[#allocation6 + $0x5]]
    %s59 = sld [smem:[#allocation6 + $0x6]]
    %s60 = sld [smem:[#allocation6 + $0x7]]
    %s61 = sld [smem:[#allocation6 + $0x8]]
    %s62 = sld [smem:[#allocation6 + $0x9]]
    %s63 = sld [smem:[#allocation6 + $0xa]]
    %s64 = sld [smem:[#allocation6 + $0xb]]
    %s65 = sld [smem:[#allocation6 + $0xc]]
    %s66 = sld [smem:[#allocation6 + $0xd]]
    %s67 = sld [smem:[#allocation6 + $0xe]]
    %s68 = sld [smem:[#allocation6 + $0xf]]
    %s69 = sld [smem:[#allocation6 + $0x10]]
    %s70 = sld [smem:[#allocation6 + $0x11]]
    %s71 = sld [smem:[#allocation6 + $0x12]]
    %s72 = sld [smem:[#allocation6 + $0x13]]
    %s73 = sld [smem:[#allocation6 + $0x14]]
    %s74 = sld [smem:[#allocation6 + $0x15]]
    %s75 = sld [smem:[#allocation6 + $0x16]]
    %s76 = sld [smem:[#allocation6 + $0x17]]
    %s77 = sld [smem:[#allocation6 + $0x18]]
    %s78 = sld [smem:[#allocation6 + $0x19]]
    %s79 = sld [smem:[#allocation6 + $0x1a]]
    %s80 = sld [smem:[#allocation6 + $0x80]]
    %s81 = sld [smem:[#allocation6 + $0x81]]
    %s82 = sld [smem:[#allocation6 + $0x82]]
    %s83 = sld [smem:[#allocation6 + $0x83]]
    %s84 = sld [smem:[#allocation6 + $0x84]]
    %s85 = sld [smem:[#allocation6 + $0x85]]
    %s86 = sld [smem:[#allocation6 + $0x86]]
    %s87 = sld [smem:[#allocation6 + $0x87]]
    %s88 = sld [smem:[#allocation6 + $0x88]]
    %s89 = sld [smem:[#allocation6 + $0x89]]
    %s90 = sld [smem:[#allocation6 + $0x8a]]
    %s91 = sld [smem:[#allocation6 + $0x8b]]
    %s92 = sld [smem:[#allocation6 + $0x8c]]
    %s93 = sld [smem:[#allocation6 + $0x8d]]
    %s94 = sld [smem:[#allocation6 + $0x8e]]
    %s95 = sld [smem:[#allocation6 + $0x8f]]
    %s96 = sld [smem:[#allocation6 + $0x90]]
    %s97 = sld [smem:[#allocation6 + $0x91]]
    %s98 = sld [smem:[#allocation6 + $0x92]]
    %s99 = sld [smem:[#allocation6 + $0x93]]
    %s100 = sld [smem:[#allocation6 + $0x94]]
    %s101 = sld [smem:[#allocation6 + $0x95]]
    %s102 = sld [smem:[#allocation6 + $0x96]]
    %s103 = sld [smem:[#allocation6 + $0x97]]
    %s104 = sld [smem:[#allocation6 + $0x98]]
    %s105 = sld [smem:[#allocation6 + $0x99]]
    %s106 = sld [smem:[#allocation6 + $0x9a]]
    %s107 = sld [smem:[#allocation6 + $0x100]]
    %s108 = sld [smem:[#allocation6 + $0x101]]
    %s109 = sld [smem:[#allocation6 + $0x102]]
    %s110 = sld [smem:[#allocation6 + $0x103]]
    %s111 = sld [smem:[#allocation6 + $0x104]]
    %s112 = sld [smem:[#allocation6 + $0x105]]
    %s113 = sld [smem:[#allocation6 + $0x106]]
    %s114 = sld [smem:[#allocation6 + $0x107]]
    %s115 = sld [smem:[#allocation6 + $0x108]]
    %s116 = sld [smem:[#allocation6 + $0x109]]
    %s117 = sld [smem:[#allocation6 + $0x10a]]
    %s118 = sld [smem:[#allocation6 + $0x10b]]
    %s119 = sld [smem:[#allocation6 + $0x10c]]
    %s120 = sld [smem:[#allocation6 + $0x10d]]
    %s121 = sld [smem:[#allocation6 + $0x10e]]
    %s122 = sld [smem:[#allocation6 + $0x10f]]
    %s123 = sld [smem:[#allocation6 + $0x110]]
    %s124 = sld [smem:[#allocation6 + $0x111]]
    %s125 = sld [smem:[#allocation6 + $0x112]]
    %s126 = sld [smem:[#allocation6 + $0x113]]
    %s127 = sld [smem:[#allocation6 + $0x114]]
    %s128 = sld [smem:[#allocation6 + $0x115]]
    %s129 = sld [smem:[#allocation6 + $0x116]]
    %s130 = sld [smem:[#allocation6 + $0x117]]
    %s131 = sld [smem:[#allocation6 + $0x118]]
    %s132 = sld [smem:[#allocation6 + $0x119]]
    %s133 = sld [smem:[#allocation6 + $0x11a]]
    %v134 = vld [vmem:[#allocation2] sm:$0xff]
    %135 = vrot.lane.b32.xlu0 %v134, 121
    %v136 = vpop.permute.xlu0 %135
    %137 = vrot.lane.b32.xlu0 %v134, 1
    %v138 = vpop.permute.xlu0 %137
    %v139 = vsel %vm51, %v136, %v138
    %140 = vrot.lane.b32.xlu0 %v134, 7
    %v141 = vpop.permute.xlu0 %140
    %142 = vrot.lane.b32.xlu0 %v134, 127
    %v143 = vpop.permute.xlu0 %142
    %v144 = vsel %vm52, %v141, %v143
    %145 = vrot.lane.b32.xlu0 %v139, 8
    %v146 = vpop.permute.xlu0 %145
    %v147 = vstv %s53
    %v148 = vmul.f32 %v147, %v146
    %v149 = vstv %s62
    %v150 = vmul.f32 %v149, %v146
    %v151 = vstv %s71
    %v152 = vmul.f32 %v151, %v146
    %v153 = vstv %s80
    %v154 = vmul.f32 %v153, %v146
    %v155 = vstv %s89
    %v156 = vmul.f32 %v155, %v146
    %v157 = vstv %s98
    %v158 = vmul.f32 %v157, %v146
    %v159 = vstv %s107
    %v160 = vmul.f32 %v159, %v146
    %v161 = vstv %s116
    %v162 = vmul.f32 %v161, %v146
    %v163 = vstv %s125
    %v164 = vmul.f32 %v163, %v146
    %165 = vrot.lane.b32.xlu0 %v134, 8
    %v166 = vpop.permute.xlu0 %165
    %v167 = vstv %s54
    %v168 = vmul.f32 %v167, %v166
    %v169 = vadd.f32 %v148, %v168
    %v170 = vstv %s63
    %v171 = vmul.f32 %v170, %v166
    %v172 = vadd.f32 %v150, %v171
    %v173 = vstv %s72
    %v174 = vmul.f32 %v173, %v166
    %v175 = vadd.f32 %v152, %v174
    %v176 = vstv %s81
    %v177 = vmul.f32 %v176, %v166
    %v178 = vadd.f32 %v154, %v177
    %v179 = vstv %s90
    %v180 = vmul.f32 %v179, %v166
    %v181 = vadd.f32 %v156, %v180
    %v182 = vstv %s99
    %v183 = vmul.f32 %v182, %v166
    %v184 = vadd.f32 %v158, %v183
    %v185 = vstv %s108
    %v186 = vmul.f32 %v185, %v166
    %v187 = vadd.f32 %v160, %v186
    %v188 = vstv %s117
    %v189 = vmul.f32 %v188, %v166
    %v190 = vadd.f32 %v162, %v189
    %v191 = vstv %s126
    %v192 = vmul.f32 %v191, %v166
    %v193 = vadd.f32 %v164, %v192
    %194 = vrot.lane.b32.xlu0 %v144, 8
    %v195 = vpop.permute.xlu0 %194
    %v196 = vstv %s55
    %v197 = vmul.f32 %v196, %v195
    %v198 = vadd.f32 %v169, %v197
    %v199 = vstv %s64
    %v200 = vmul.f32 %v199, %v195
    %v201 = vadd.f32 %v172, %v200
    %v202 = vstv %s73
    %v203 = vmul.f32 %v202, %v195
    %v204 = vadd.f32 %v175, %v203
    %v205 = vstv %s82
    %v206 = vmul.f32 %v205, %v195
    %v207 = vadd.f32 %v178, %v206
    %v208 = vstv %s91
    %v209 = vmul.f32 %v208, %v195
    %v210 = vadd.f32 %v181, %v209
    %v211 = vstv %s100
    %v212 = vmul.f32 %v211, %v195
    %v213 = vadd.f32 %v184, %v212
    %v214 = vstv %s109
    %v215 = vmul.f32 %v214, %v195
    %v216 = vadd.f32 %v187, %v215
    %v217 = vstv %s118
    %v218 = vmul.f32 %v217, %v195
    %v219 = vadd.f32 %v190, %v218
    %v220 = vstv %s127
    %v221 = vmul.f32 %v220, %v195
    %v222 = vadd.f32 %v193, %v221
    %v223 = vstv %s56
    %v224 = vmul.f32 %v223, %v139
    %v225 = vadd.f32 %v198, %v224
    %v226 = vstv %s65
    %v227 = vmul.f32 %v226, %v139
    %v228 = vadd.f32 %v201, %v227
    %v229 = vstv %s74
    %v230 = vmul.f32 %v229, %v139
    %v231 = vadd.f32 %v204, %v230
    %v232 = vstv %s83
    %v233 = vmul.f32 %v232, %v139
    %v234 = vadd.f32 %v207, %v233
    %v235 = vstv %s92
    %v236 = vmul.f32 %v235, %v139
    %v237 = vadd.f32 %v210, %v236
    %v238 = vstv %s101
    %v239 = vmul.f32 %v238, %v139
    %v240 = vadd.f32 %v213, %v239
    %v241 = vstv %s110
    %v242 = vmul.f32 %v241, %v139
    %v243 = vadd.f32 %v216, %v242
    %v244 = vstv %s119
    %v245 = vmul.f32 %v244, %v139
    %v246 = vadd.f32 %v219, %v245
    %v247 = vstv %s128
    %v248 = vmul.f32 %v247, %v139
    %v249 = vadd.f32 %v222, %v248
    %v250 = vstv %s57
    %v251 = vmul.f32 %v250, %v134
    %v252 = vadd.f32 %v225, %v251
    %v253 = vstv %s66
    %v254 = vmul.f32 %v253, %v134
    %v255 = vadd.f32 %v228, %v254
    %v256 = vstv %s75
    %v257 = vmul.f32 %v256, %v134
    %v258 = vadd.f32 %v231, %v257
    %v259 = vstv %s84
    %v260 = vmul.f32 %v259, %v134
    %v261 = vadd.f32 %v234, %v260
    %v262 = vstv %s93
    %v263 = vmul.f32 %v262, %v134
    %v264 = vadd.f32 %v237, %v263
    %v265 = vstv %s102
    %v266 = vmul.f32 %v265, %v134
    %v267 = vadd.f32 %v240, %v266
    %v268 = vstv %s111
    %v269 = vmul.f32 %v268, %v134
    %v270 = vadd.f32 %v243, %v269
    %v271 = vstv %s120
    %v272 = vmul.f32 %v271, %v134
    %v273 = vadd.f32 %v246, %v272
    %v274 = vstv %s129
    %v275 = vmul.f32 %v274, %v134
    %v276 = vadd.f32 %v249, %v275
    %v277 = vstv %s58
    %v278 = vmul.f32 %v277, %v144
    %v279 = vadd.f32 %v252, %v278
    %v280 = vstv %s67
    %v281 = vmul.f32 %v280, %v144
    %v282 = vadd.f32 %v255, %v281
    %v283 = vstv %s76
    %v284 = vmul.f32 %v283, %v144
    %v285 = vadd.f32 %v258, %v284
    %v286 = vstv %s85
    %v287 = vmul.f32 %v286, %v144
    %v288 = vadd.f32 %v261, %v287
    %v289 = vstv %s94
    %v290 = vmul.f32 %v289, %v144
    %v291 = vadd.f32 %v264, %v290
    %v292 = vstv %s103
    %v293 = vmul.f32 %v292, %v144
    %v294 = vadd.f32 %v267, %v293
    %v295 = vstv %s112
    %v296 = vmul.f32 %v295, %v144
    %v297 = vadd.f32 %v270, %v296
    %v298 = vstv %s121
    %v299 = vmul.f32 %v298, %v144
    %v300 = vadd.f32 %v273, %v299
    %v301 = vstv %s130
    %v302 = vmul.f32 %v301, %v144
    %v303 = vadd.f32 %v276, %v302
    %304 = vrot.lane.b32.xlu0 %v139, 120
    %v305 = vpop.permute.xlu0 %304
    %v306 = vstv %s59
    %v307 = vmul.f32 %v306, %v305
    %v308 = vadd.f32 %v279, %v307
    %v309 = vstv %s68
    %v310 = vmul.f32 %v309, %v305
    %v311 = vadd.f32 %v282, %v310
    %v312 = vstv %s77
    %v313 = vmul.f32 %v312, %v305
    %v314 = vadd.f32 %v285, %v313
    %v315 = vstv %s86
    %v316 = vmul.f32 %v315, %v305
    %v317 = vadd.f32 %v288, %v316
    %v318 = vstv %s95
    %v319 = vmul.f32 %v318, %v305
    %v320 = vadd.f32 %v291, %v319
    %v321 = vstv %s104
    %v322 = vmul.f32 %v321, %v305
    %v323 = vadd.f32 %v294, %v322
    %v324 = vstv %s113
    %v325 = vmul.f32 %v324, %v305
    %v326 = vadd.f32 %v297, %v325
    %v327 = vstv %s122
    %v328 = vmul.f32 %v327, %v305
    %v329 = vadd.f32 %v300, %v328
    %v330 = vstv %s131
    %v331 = vmul.f32 %v330, %v305
    %v332 = vadd.f32 %v303, %v331
    %333 = vrot.lane.b32.xlu0 %v134, 120
    %v334 = vpop.permute.xlu0 %333
    %v335 = vstv %s60
    %v336 = vmul.f32 %v335, %v334
    %v337 = vadd.f32 %v308, %v336
    %v338 = vstv %s69
    %v339 = vmul.f32 %v338, %v334
    %v340 = vadd.f32 %v311, %v339
    %v341 = vstv %s78
    %v342 = vmul.f32 %v341, %v334
    %v343 = vadd.f32 %v314, %v342
    %v344 = vstv %s87
    %v345 = vmul.f32 %v344, %v334
    %v346 = vadd.f32 %v317, %v345
    %v347 = vstv %s96
    %v348 = vmul.f32 %v347, %v334
    %v349 = vadd.f32 %v320, %v348
    %v350 = vstv %s105
    %v351 = vmul.f32 %v350, %v334
    %v352 = vadd.f32 %v323, %v351
    %v353 = vstv %s114
    %v354 = vmul.f32 %v353, %v334
    %v355 = vadd.f32 %v326, %v354
    %v356 = vstv %s123
    %v357 = vmul.f32 %v356, %v334
    %v358 = vadd.f32 %v329, %v357
    %v359 = vstv %s132
    %v360 = vmul.f32 %v359, %v334
    %v361 = vadd.f32 %v332, %v360
    %362 = vrot.lane.b32.xlu0 %v144, 120
    %v363 = vpop.permute.xlu0 %362
    %v364 = vstv %s61
    %v365 = vmul.f32 %v364, %v363
    %v366 = vadd.f32 %v337, %v365
    %v367 = vstv %s70
    %v368 = vmul.f32 %v367, %v363
    %v369 = vadd.f32 %v340, %v368
    %v370 = vstv %s79
    %v371 = vmul.f32 %v370, %v363
    %v372 = vadd.f32 %v343, %v371
    %v373 = vstv %s88
    %v374 = vmul.f32 %v373, %v363
    %v375 = vadd.f32 %v346, %v374
    %v376 = vstv %s97
    %v377 = vmul.f32 %v376, %v363
    %v378 = vadd.f32 %v349, %v377
    %v379 = vstv %s106
    %v380 = vmul.f32 %v379, %v363
    %v381 = vadd.f32 %v352, %v380
    %v382 = vstv %s115
    %v383 = vmul.f32 %v382, %v363
    %v384 = vadd.f32 %v355, %v383
    %v385 = vstv %s124
    %v386 = vmul.f32 %v385, %v363
    %v387 = vadd.f32 %v358, %v386
    %v388 = vstv %s133
    %v389 = vmul.f32 %v388, %v363
    %v390 = vadd.f32 %v361, %v389
    %v391 = vrot.slane %v366, 7
    %v392 = vadd.f32 %v369, %v391
    %v393 = vrot.slane %v372, 1
    %v394 = vadd.f32 %v392, %v393
    %395 = vst [vmem:[#allocation7] sm:$0xff] %v394
    %v396 = vrot.slane %v375, 7
    %v397 = vadd.f32 %v378, %v396
    %v398 = vrot.slane %v381, 1
    %v399 = vadd.f32 %v397, %v398
    %s400 = scalar_lea.vmem [#allocation7], 8
    %401 = vst [vmem:[%s400] sm:$0xff] %v399
    %v402 = vrot.slane %v384, 7
    %v403 = vadd.f32 %v387, %v402
    %v404 = vrot.slane %v390, 1
    %v405 = vadd.f32 %v403, %v404
    %s406 = scalar_lea.vmem [#allocation7], 16
    %407 = vst [vmem:[%s406] sm:$0xff] %v405
    %s408 = scalar_lea.vmem [#allocation2], 8
    %v409 = vld [vmem:[%s408] sm:$0xff]
    %410 = vrot.lane.b32.xlu0 %v409, 121
    %v411 = vpop.permute.xlu0 %410
    %412 = vrot.lane.b32.xlu0 %v409, 1
    %v413 = vpop.permute.xlu0 %412
    %v414 = vsel %vm51, %v411, %v413
    %415 = vrot.lane.b32.xlu0 %v409, 7
    %v416 = vpop.permute.xlu0 %415
    %417 = vrot.lane.b32.xlu0 %v409, 127
    %v418 = vpop.permute.xlu0 %417
    %v419 = vsel %vm52, %v416, %v418
    %420 = vrot.lane.b32.xlu0 %v414, 8
    %v421 = vpop.permute.xlu0 %420
    %v422 = vmul.f32 %v147, %v421
    %v423 = vmul.f32 %v149, %v421
    %v424 = vmul.f32 %v151, %v421
    %v425 = vmul.f32 %v153, %v421
    %v426 = vmul.f32 %v155, %v421
    %v427 = vmul.f32 %v157, %v421
    %v428 = vmul.f32 %v159, %v421
    %v429 = vmul.f32 %v161, %v421
    %v430 = vmul.f32 %v163, %v421
    %431 = vrot.lane.b32.xlu0 %v409, 8
    %v432 = vpop.permute.xlu0 %431
    %v433 = vmul.f32 %v167, %v432
    %v434 = vadd.f32 %v422, %v433
    %v435 = vmul.f32 %v170, %v432
    %v436 = vadd.f32 %v423, %v435
    %v437 = vmul.f32 %v173, %v432
    %v438 = vadd.f32 %v424, %v437
    %v439 = vmul.f32 %v176, %v432
    %v440 = vadd.f32 %v425, %v439
    %v441 = vmul.f32 %v179, %v432
    %v442 = vadd.f32 %v426, %v441
    %v443 = vmul.f32 %v182, %v432
    %v444 = vadd.f32 %v427, %v443
    %v445 = vmul.f32 %v185, %v432
    %v446 = vadd.f32 %v428, %v445
    %v447 = vmul.f32 %v188, %v432
    %v448 = vadd.f32 %v429, %v447
    %v449 = vmul.f32 %v191, %v432
    %v450 = vadd.f32 %v430, %v449
    %451 = vrot.lane.b32.xlu0 %v419, 8
    %v452 = vpop.permute.xlu0 %451
    %v453 = vmul.f32 %v196, %v452
    %v454 = vadd.f32 %v434, %v453
    %v455 = vmul.f32 %v199, %v452
    %v456 = vadd.f32 %v436, %v455
    %v457 = vmul.f32 %v202, %v452
    %v458 = vadd.f32 %v438, %v457
    %v459 = vmul.f32 %v205, %v452
    %v460 = vadd.f32 %v440, %v459
    %v461 = vmul.f32 %v208, %v452
    %v462 = vadd.f32 %v442, %v461
    %v463 = vmul.f32 %v211, %v452
    %v464 = vadd.f32 %v444, %v463
    %v465 = vmul.f32 %v214, %v452
    %v466 = vadd.f32 %v446, %v465
    %v467 = vmul.f32 %v217, %v452
    %v468 = vadd.f32 %v448, %v467
    %v469 = vmul.f32 %v220, %v452
    %v470 = vadd.f32 %v450, %v469
    %v471 = vmul.f32 %v223, %v414
    %v472 = vadd.f32 %v454, %v471
    %v473 = vmul.f32 %v226, %v414
    %v474 = vadd.f32 %v456, %v473
    %v475 = vmul.f32 %v229, %v414
    %v476 = vadd.f32 %v458, %v475
    %v477 = vmul.f32 %v232, %v414
    %v478 = vadd.f32 %v460, %v477
    %v479 = vmul.f32 %v235, %v414
    %v480 = vadd.f32 %v462, %v479
    %v481 = vmul.f32 %v238, %v414
    %v482 = vadd.f32 %v464, %v481
    %v483 = vmul.f32 %v241, %v414
    %v484 = vadd.f32 %v466, %v483
    %v485 = vmul.f32 %v244, %v414
    %v486 = vadd.f32 %v468, %v485
    %v487 = vmul.f32 %v247, %v414
    %v488 = vadd.f32 %v470, %v487
    %v489 = vmul.f32 %v250, %v409
    %v490 = vadd.f32 %v472, %v489
    %v491 = vmul.f32 %v253, %v409
    %v492 = vadd.f32 %v474, %v491
    %v493 = vmul.f32 %v256, %v409
    %v494 = vadd.f32 %v476, %v493
    %v495 = vmul.f32 %v259, %v409
    %v496 = vadd.f32 %v478, %v495
    %v497 = vmul.f32 %v262, %v409
    %v498 = vadd.f32 %v480, %v497
    %v499 = vmul.f32 %v265, %v409
    %v500 = vadd.f32 %v482, %v499
    %v501 = vmul.f32 %v268, %v409
    %v502 = vadd.f32 %v484, %v501
    %v503 = vmul.f32 %v271, %v409
    %v504 = vadd.f32 %v486, %v503
    %v505 = vmul.f32 %v274, %v409
    %v506 = vadd.f32 %v488, %v505
    %v507 = vmul.f32 %v277, %v419
    %v508 = vadd.f32 %v490, %v507
    %v509 = vmul.f32 %v280, %v419
    %v510 = vadd.f32 %v492, %v509
    %v511 = vmul.f32 %v283, %v419
    %v512 = vadd.f32 %v494, %v511
    %v513 = vmul.f32 %v286, %v419
    %v514 = vadd.f32 %v496, %v513
    %v515 = vmul.f32 %v289, %v419
    %v516 = vadd.f32 %v498, %v515
    %v517 = vmul.f32 %v292, %v419
    %v518 = vadd.f32 %v500, %v517
    %v519 = vmul.f32 %v295, %v419
    %v520 = vadd.f32 %v502, %v519
    %v521 = vmul.f32 %v298, %v419
    %v522 = vadd.f32 %v504, %v521
    %v523 = vmul.f32 %v301, %v419
    %v524 = vadd.f32 %v506, %v523
    %525 = vrot.lane.b32.xlu0 %v414, 120
    %v526 = vpop.permute.xlu0 %525
    %v527 = vmul.f32 %v306, %v526
    %v528 = vadd.f32 %v508, %v527
    %v529 = vmul.f32 %v309, %v526
    %v530 = vadd.f32 %v510, %v529
    %v531 = vmul.f32 %v312, %v526
    %v532 = vadd.f32 %v512, %v531
    %v533 = vmul.f32 %v315, %v526
    %v534 = vadd.f32 %v514, %v533
    %v535 = vmul.f32 %v318, %v526
    %v536 = vadd.f32 %v516, %v535
    %v537 = vmul.f32 %v321, %v526
    %v538 = vadd.f32 %v518, %v537
    %v539 = vmul.f32 %v324, %v526
    %v540 = vadd.f32 %v520, %v539
    %v541 = vmul.f32 %v327, %v526
    %v542 = vadd.f32 %v522, %v541
    %v543 = vmul.f32 %v330, %v526
    %v544 = vadd.f32 %v524, %v543
    %545 = vrot.lane.b32.xlu0 %v409, 120
    %v546 = vpop.permute.xlu0 %545
    %v547 = vmul.f32 %v335, %v546
    %v548 = vadd.f32 %v528, %v547
    %v549 = vmul.f32 %v338, %v546
    %v550 = vadd.f32 %v530, %v549
    %v551 = vmul.f32 %v341, %v546
    %v552 = vadd.f32 %v532, %v551
    %v553 = vmul.f32 %v344, %v546
    %v554 = vadd.f32 %v534, %v553
    %v555 = vmul.f32 %v347, %v546
    %v556 = vadd.f32 %v536, %v555
    %v557 = vmul.f32 %v350, %v546
    %v558 = vadd.f32 %v538, %v557
    %v559 = vmul.f32 %v353, %v546
    %v560 = vadd.f32 %v540, %v559
    %v561 = vmul.f32 %v356, %v546
    %v562 = vadd.f32 %v542, %v561
    %v563 = vmul.f32 %v359, %v546
    %v564 = vadd.f32 %v544, %v563
    %565 = vrot.lane.b32.xlu0 %v419, 120
    %v566 = vpop.permute.xlu0 %565
    %v567 = vmul.f32 %v364, %v566
    %v568 = vadd.f32 %v548, %v567
    %v569 = vmul.f32 %v367, %v566
    %v570 = vadd.f32 %v550, %v569
    %v571 = vmul.f32 %v370, %v566
    %v572 = vadd.f32 %v552, %v571
    %v573 = vmul.f32 %v373, %v566
    %v574 = vadd.f32 %v554, %v573
    %v575 = vmul.f32 %v376, %v566
    %v576 = vadd.f32 %v556, %v575
    %v577 = vmul.f32 %v379, %v566
    %v578 = vadd.f32 %v558, %v577
    %v579 = vmul.f32 %v382, %v566
    %v580 = vadd.f32 %v560, %v579
    %v581 = vmul.f32 %v385, %v566
    %v582 = vadd.f32 %v562, %v581
    %v583 = vmul.f32 %v388, %v566
    %v584 = vadd.f32 %v564, %v583
    %v585 = vrot.slane %v568, 7
    %v586 = vadd.f32 %v570, %v585
    %v587 = vrot.slane %v572, 1
    %v588 = vadd.f32 %v586, %v587
    %s589 = scalar_lea.vmem [#allocation7], 24
    %590 = vst [vmem:[%s589] sm:$0xff] %v588
    %v591 = vrot.slane %v574, 7
    %v592 = vadd.f32 %v576, %v591
    %v593 = vrot.slane %v578, 1
    %v594 = vadd.f32 %v592, %v593
    %s595 = scalar_lea.vmem [#allocation7], 32
    %596 = vst [vmem:[%s595] sm:$0xff] %v594
    %v597 = vrot.slane %v580, 7
    %v598 = vadd.f32 %v582, %v597
    %v599 = vrot.slane %v584, 1
    %v600 = vadd.f32 %v598, %v599
    %s601 = scalar_lea.vmem [#allocation7], 40
    %602 = vst [vmem:[%s601] sm:$0xff] %v600
    // Predicated region
    $region18: #{tpu_custom_call.1} parent=1 // pred_check
      _
    $region19: #{tpu_custom_call.1} parent=1 // pred_check_branch
      %604 = sbr.rel (0) target = $region21
    $region20: #{tpu_custom_call.1} parent=1 // pred_region
      %s606 = ssub.s32 768, 768
      %607 = vsyncadd [#allocation4], %s606
      %s608 = sshll.u32 [#allocation7], 4
      %s609 = int_to_ptr.vmem [resolvable:$true] %s608
      %614 = dma.vmem_to_hbm [thread:$0]  %s609, 768, %s2, [#allocation4], 128, 128, 8
    $region21: #{tpu_custom_call.1} parent=1 // pred_fallthru
      _
    // Predicated region
    $region22: #{tpu_custom_call.1} parent=1 // pred_check
      _
    $region23: #{tpu_custom_call.1} parent=1 // pred_check_branch
      %616 = sbr.rel (0) target = $region25
    $region24: #{tpu_custom_call.1} parent=1 // pred_region
      %617 = dma.done [#allocation4], 768
    $region25: #{tpu_custom_call.1} parent=1 // pred_fallthru
      _
    %618 = vsyncpa [#allocation3], 1
    %619 = vsyncpa [#allocation4], 1
    %620 = vsyncpa [#allocation5], 1

</llo_original>
